<compile_context>
chip_gen: v6e
topology: v6e:2x2x1
jax: 0.10.0
libtpu: 0.0.40
codegen_flags: <defaults>
</compile_context>

<pallas_src>
import functools
import math

import jax
import jax.numpy as jnp
import numpy as np
from jax.experimental import pallas as pl
from jax.experimental.pallas import tpu as pltpu

EPS = 1e-5  # nn.LayerNorm default eps


def _layernorm(x, g, b):
    mu = jnp.mean(x, axis=-1, keepdims=True)
    var = jnp.mean((x - mu) ** 2, axis=-1, keepdims=True)
    return (x - mu) * jax.lax.rsqrt(var + EPS) * g + b


def mfuser_kernel(src_q_ref, pos_q_ref, src_k_ref, pos_k_ref,
                  g1_ref, b1_ref, g2_ref, b2_ref, g3_ref, b3_ref,
                  wq_ref, bq_ref, wkv_ref, bkv_ref, wo_ref, bo_ref,
                  w1_ref, fb1_ref, w2_ref, fb2_ref,
                  out_ref,
                  m_sc, l_sc, acc_sc, q_sc, s2q_sc):
    ki = pl.program_id(2)
    nk = pl.num_programs(2)
    d_model = out_ref.shape[-1]

    # ---- first key tile for this (batch, query-tile): set up Q and softmax state.
    @pl.when(ki == 0)
    def _init():
        src_q = src_q_ref[0].astype(jnp.float32)
        pos_q = pos_q_ref[0].astype(jnp.float32)
        s2q = _layernorm(src_q, g1_ref[...], b1_ref[...]) + pos_q   # norm1(src)+pos
        s2q_sc[...] = s2q
        # 1/sqrt(d_model) is already folded into wq / bq in the wrapper.
        q = jnp.dot(s2q.astype(jnp.bfloat16), wq_ref[...],
                    preferred_element_type=jnp.float32) + bq_ref[...]
        q_sc[...] = q.astype(jnp.bfloat16)
        m_sc[...] = jnp.full(m_sc.shape, -jnp.inf, jnp.float32)
        l_sc[...] = jnp.zeros(l_sc.shape, jnp.float32)
        acc_sc[...] = jnp.zeros(acc_sc.shape, jnp.float32)

    # ---- K/V for this key tile (fused (D, 2D) projection, bf16 on the MXU).
    src_k = src_k_ref[0].astype(jnp.float32)
    pos_k = pos_k_ref[0].astype(jnp.float32)
    s2k = _layernorm(src_k, g1_ref[...], b1_ref[...]) + pos_k
    kv = jnp.dot(s2k.astype(jnp.bfloat16), wkv_ref[...],
                 preferred_element_type=jnp.float32) + bkv_ref[...]
    k = kv[:, :d_model].astype(jnp.bfloat16)
    v = kv[:, d_model:].astype(jnp.bfloat16)

    # ---- online softmax over key tiles (only a (tq, tk) score tile is live).
    # NT dot_general: MXU consumes the transposed RHS directly, no XLU transpose.
    s = jax.lax.dot_general(q_sc[...], k, (((1,), (1,)), ((), ())),
                            preferred_element_type=jnp.float32)
    m_new = jnp.maximum(m_sc[...], jnp.max(s, axis=-1, keepdims=True))
    alpha = jnp.exp(m_sc[...] - m_new)
    p = jnp.exp(s - m_new)
    l_sc[...] = alpha * l_sc[...] + jnp.sum(p, axis=-1, keepdims=True)
    acc_sc[...] = alpha * acc_sc[...] + jnp.dot(
        p.astype(jnp.bfloat16), v, preferred_element_type=jnp.float32)
    m_sc[...] = m_new

    # ---- last key tile: attention out-projection, residuals, FFN, final norm.
    @pl.when(ki == nk - 1)
    def _finalize():
        ctx = acc_sc[...] * pl.reciprocal(l_sc[...], approx=True)
        attn_out = jnp.dot(ctx.astype(jnp.bfloat16), wo_ref[...],
                           preferred_element_type=jnp.float32) + bo_ref[...]
        # residuals (dropout == identity in eval mode):
        #   src2 = src2 + attn_out ; src = src + src2
        src_q = src_q_ref[0].astype(jnp.float32)
        x = src_q + s2q_sc[...] + attn_out
        # FFN: linear2(relu(linear1(norm2(x))))
        s3 = _layernorm(x, g2_ref[...], b2_ref[...])
        h = jnp.maximum(
            jnp.dot(s3.astype(jnp.bfloat16), w1_ref[...],
                    preferred_element_type=jnp.float32) + fb1_ref[...], 0.0)
        ff = jnp.dot(h.astype(jnp.bfloat16), w2_ref[...],
                     preferred_element_type=jnp.float32) + fb2_ref[...]
        x = x + ff
        out_ref[0] = _layernorm(x, g3_ref[...], b3_ref[...]).astype(out_ref.dtype)


def _pick_tile(S, target):
    """Largest divisor of S that is <= target and a multiple of 8 (fallback: S)."""
    if S <= target:
        return S
    for t in range(target, 7, -1):
        if S % t == 0 and t % 8 == 0:
            return t
    return S


@functools.partial(jax.jit, static_argnames=("tq", "tk"))
def _mfuser_call(src_sbd, pos_sbd, kp, tq, tk):
    # Boundary transposes kept so the interface matches the PyTorch module
    # ((S,B,D) in / out); drop them if upstream can supply batch-major tensors.
    src = jnp.transpose(src_sbd, (1, 0, 2))   # (B, S, D)
    pos = jnp.transpose(pos_sbd, (1, 0, 2))
    B, S, D = src.shape
    H = kp["w1"].shape[1]
    nq, nk = S // tq, S // tk

    def const(shape):
        n = len(shape)
        return pl.BlockSpec(shape, lambda b, qi, ki, _n=n: (0,) * _n)

    q_blk = pl.BlockSpec((1, tq, D), lambda b, qi, ki: (b, qi, 0))
    k_blk = pl.BlockSpec((1, tk, D), lambda b, qi, ki: (b, ki, 0))

    in_specs = [
        q_blk, q_blk, k_blk, k_blk,               # src/pos query tile, src/pos key tile
        const((1, D)), const((1, D)),             # norm1 gamma/beta
        const((1, D)), const((1, D)),             # norm2 gamma/beta
        const((1, D)), const((1, D)),             # norm3 gamma/beta
        const((D, D)), const((1, D)),             # Wq (pre-scaled), bq (pre-scaled)
        const((D, 2 * D)), const((1, 2 * D)),     # fused [Wk|Wv], [bk|bv]
        const((D, D)), const((1, D)),             # Wo, bo
        const((D, H)), const((1, H)),             # W1, b1 (FFN)
        const((H, D)), const((1, D)),             # W2, b2 (FFN)
    ]

    scratch_shapes = [
        pltpu.VMEM((tq, 1), jnp.float32),         # running max
        pltpu.VMEM((tq, 1), jnp.float32),         # running sum
        pltpu.VMEM((tq, D), jnp.float32),         # attention accumulator
        pltpu.VMEM((tq, D), jnp.bfloat16),        # cached query tile
        pltpu.VMEM((tq, D), jnp.float32),         # cached src2 = norm1(src)+pos tile
    ]

    # Rough VMEM budget: double-buffered activation blocks + resident bf16
    # weights + scratch + in-kernel temporaries, with generous headroom.
    act = 2 * 4 * (2 * tq * D + 2 * tk * D + tq * D)
    wgt = 2 * (2 * (4 * D * D + 2 * D * H) + 4 * (11 * D + H))
    scr = 4 * (2 * tq + 2 * tq * D) + 2 * tq * D
    tmp = 4 * (4 * tq * tk + 2 * tq * H + 2 * tk * D + 4 * tq * D)
    # Cap below v7x's 64 MiB physical VMEM; floor at 32 MiB (safe on all gens).
    vmem_limit = int(min(max(4 * (act + wgt + scr + tmp), 32 * 2 ** 20), 48 * 2 ** 20))

    cost = pl.CostEstimate(
        flops=int(2 * B * S * D * (4 * D + 2 * H) + 4 * B * S * S * D),
        transcendentals=int(B * S * S + B * S),
        bytes_accessed=int(4 * 3 * B * S * D + 2 * (4 * D * D + 2 * D * H)),
    )

    out = pl.pallas_call(
        mfuser_kernel,
        out_shape=jax.ShapeDtypeStruct((B, S, D), src.dtype),
        grid_spec=pltpu.PrefetchScalarGridSpec(
            num_scalar_prefetch=0,
            grid=(B, nq, nk),
            in_specs=in_specs,
            out_specs=q_blk,
            scratch_shapes=scratch_shapes),
        compiler_params=pltpu.CompilerParams(
            dimension_semantics=("parallel", "parallel", "arbitrary"),
            vmem_limit_bytes=vmem_limit),
        cost_estimate=cost,
    )(src, pos, src, pos,
      kp["g1"], kp["b1"], kp["g2"], kp["b2"], kp["g3"], kp["b3"],
      kp["wq"], kp["bq"], kp["wkv"], kp["bkv"], kp["wo"], kp["bo"],
      kp["w1"], kp["fb1"], kp["w2"], kp["fb2"])
    return jnp.transpose(out, (1, 0, 2))   # back to (S, B, D)


def mfuser_forward(src_sbd, pos_sbd, kp, *, tq_target=256, tk_target=512):
    """src_sbd, pos_sbd: (S, B, D). Returns (S, B, D), matching the PyTorch module."""
    S = src_sbd.shape[0]
    return _mfuser_call(src_sbd, pos_sbd, kp,
                        tq=_pick_tile(S, tq_target), tk=_pick_tile(S, tk_target))


def init_params(key, d_model, d_hidden):
    """Deterministic synthetic model params, weights pre-transposed as (in, out), f32."""
    ks = jax.random.split(key, 18)

    def xavier(k, fan_in, fan_out):
        bound = math.sqrt(6.0 / (fan_in + fan_out))
        return jax.random.uniform(k, (fan_in, fan_out), jnp.float32, -bound, bound)

    def small(k, n):
        return 0.05 * jax.random.normal(k, (1, n), jnp.float32)

    D, H = d_model, d_hidden
    return {
        "g1": 1.0 + small(ks[0], D), "b1": small(ks[1], D),
        "g2": 1.0 + small(ks[2], D), "b2": small(ks[3], D),
        "g3": 1.0 + small(ks[4], D), "b3": small(ks[5], D),
        "wq_t": xavier(ks[6], D, D), "wk_t": xavier(ks[7], D, D), "wv_t": xavier(ks[8], D, D),
        "bq": small(ks[9], D), "bk": small(ks[10], D), "bv": small(ks[11], D),
        "wo_t": xavier(ks[12], D, D), "bo": small(ks[13], D),
        "w1_t": xavier(ks[14], D, H), "fb1": small(ks[15], H),
        "w2_t": xavier(ks[16], H, D), "fb2": small(ks[17], D),
    }


def pack_params(p):
    """Kernel-ready params: bf16 weights, fused KV projection, 1/sqrt(D) folded into Q."""
    D = p["wq_t"].shape[0]
    scale = 1.0 / math.sqrt(D)
    return {
        "g1": p["g1"], "b1": p["b1"],
        "g2": p["g2"], "b2": p["b2"],
        "g3": p["g3"], "b3": p["b3"],
        "wq": (p["wq_t"] * scale).astype(jnp.bfloat16), "bq": p["bq"] * scale,
        "wkv": jnp.concatenate([p["wk_t"], p["wv_t"]], axis=1).astype(jnp.bfloat16),
        "bkv": jnp.concatenate([p["bk"], p["bv"]], axis=1),
        "wo": p["wo_t"].astype(jnp.bfloat16), "bo": p["bo"],
        "w1": p["w1_t"].astype(jnp.bfloat16), "fb1": p["fb1"],
        "w2": p["w2_t"].astype(jnp.bfloat16), "fb2": p["fb2"],
    }


def ref_forward(src_sbd, pos_sbd, kp):
    """Pure-JAX reference: eval-mode PyTorch forward with the same numerical
    contract as the kernel (bf16 matmul inputs, f32 accumulation)."""
    hp = jax.lax.Precision.HIGHEST
    bf, f32 = jnp.bfloat16, jnp.float32
    src = jnp.transpose(src_sbd, (1, 0, 2)).astype(f32)
    pos = jnp.transpose(pos_sbd, (1, 0, 2)).astype(f32)
    D = src.shape[-1]

    def ln(x, g, b):
        mu = x.mean(-1, keepdims=True)
        var = ((x - mu) ** 2).mean(-1, keepdims=True)
        return (x - mu) / jnp.sqrt(var + EPS) * g + b

    def mm(x, w):  # bf16-input, f32-accumulate matmul
        return jnp.einsum("bsd,de->bse", x.astype(bf).astype(f32),
                          w.astype(f32), precision=hp)

    s2 = ln(src, kp["g1"], kp["b1"]) + pos
    q = mm(s2, kp["wq"]) + kp["bq"]                 # scale already folded in
    kv = mm(s2, kp["wkv"]) + kp["bkv"]
    k, v = kv[..., :D], kv[..., D:]
    sc = jnp.einsum("bqd,bkd->bqk", q.astype(bf).astype(f32),
                    k.astype(bf).astype(f32), precision=hp)
    p = jax.nn.softmax(sc, axis=-1)
    ctx = jnp.einsum("bqk,bkd->bqd", p.astype(bf).astype(f32),
                     v.astype(bf).astype(f32), precision=hp)
    attn_out = mm(ctx, kp["wo"]) + kp["bo"]
    x = src + s2 + attn_out
    s3 = ln(x, kp["g2"], kp["b2"])
    h = jax.nn.relu(mm(s3, kp["w1"]) + kp["fb1"])
    ff = mm(h, kp["w2"]) + kp["fb2"]
    x = x + ff
    x = ln(x, kp["g3"], kp["b3"])
    return jnp.transpose(x, (1, 0, 2))


if __name__ == "__main__":
    # Small but lane-dense test shapes: seq=32, batch=2, d_model=128, d_hidden=256.
    S, B, D, H = 32, 2, 128, 256
    key = jax.random.PRNGKey(0)
    k_src, k_pos, k_par = jax.random.split(key, 3)
    src = jax.random.normal(k_src, (S, B, D), jnp.float32)
    pos = jax.random.normal(k_pos, (S, B, D), jnp.float32)
    kp = pack_params(init_params(k_par, D, H))

    # Small tile targets so the test exercises multiple query AND key tiles
    # (grid = (2, 2, 2)), i.e. the online-softmax accumulation path.
    out = jax.block_until_ready(mfuser_forward(src, pos, kp, tq_target=16, tk_target=16))
    ref = jax.block_until_ready(ref_forward(src, pos, kp))

    # Tolerance accounts for bf16 matmul inputs, accumulation order and the
    # approximate reciprocal in the softmax normalization (output is LayerNorm'd).
    np.testing.assert_allclose(np.asarray(out), np.asarray(ref), rtol=2e-2, atol=2e-2)
    assert out.shape == (S, B, D)
    print("KERNEL_OK")
</pallas_src>

<mosaic_0001>
module attributes {stable_mosaic.version = 11 : i64} {
  func.func @mfuser_kernel(%arg0: i32, %arg1: i32, %arg2: i32, %arg3: memref<1x16x128xf32, #tpu.memory_space<vmem>>, %arg4: memref<1x16x128xf32, #tpu.memory_space<vmem>>, %arg5: memref<1x16x128xf32, #tpu.memory_space<vmem>>, %arg6: memref<1x16x128xf32, #tpu.memory_space<vmem>>, %arg7: memref<1x128xf32, #tpu.memory_space<vmem>>, %arg8: memref<1x128xf32, #tpu.memory_space<vmem>>, %arg9: memref<1x128xf32, #tpu.memory_space<vmem>>, %arg10: memref<1x128xf32, #tpu.memory_space<vmem>>, %arg11: memref<1x128xf32, #tpu.memory_space<vmem>>, %arg12: memref<1x128xf32, #tpu.memory_space<vmem>>, %arg13: memref<128x128xbf16, #tpu.memory_space<vmem>>, %arg14: memref<1x128xf32, #tpu.memory_space<vmem>>, %arg15: memref<128x256xbf16, #tpu.memory_space<vmem>>, %arg16: memref<1x256xf32, #tpu.memory_space<vmem>>, %arg17: memref<128x128xbf16, #tpu.memory_space<vmem>>, %arg18: memref<1x128xf32, #tpu.memory_space<vmem>>, %arg19: memref<128x256xbf16, #tpu.memory_space<vmem>>, %arg20: memref<1x256xf32, #tpu.memory_space<vmem>>, %arg21: memref<256x128xbf16, #tpu.memory_space<vmem>>, %arg22: memref<1x128xf32, #tpu.memory_space<vmem>>, %arg23: memref<1x16x128xf32, #tpu.memory_space<vmem>>, %arg24: memref<16x1xf32, #tpu.memory_space<vmem>>, %arg25: memref<16x1xf32, #tpu.memory_space<vmem>>, %arg26: memref<16x128xf32, #tpu.memory_space<vmem>>, %arg27: memref<16x128xbf16, #tpu.memory_space<vmem>>, %arg28: memref<16x128xf32, #tpu.memory_space<vmem>>) attributes {dimension_semantics = [#tpu.dimension_semantics<parallel>, #tpu.dimension_semantics<parallel>, #tpu.dimension_semantics<arbitrary>], iteration_bounds = array<i64: 2, 2, 2>, scalar_prefetch = 0 : i64, scratch_operands = 5 : i64, tpu.core_type = #tpu.core_type<tc>, window_params = [{transform_indices = @transform_0, window_bounds = array<i64: 1, 16, 128>}, {transform_indices = @transform_1, window_bounds = array<i64: 1, 16, 128>}, {transform_indices = @transform_2, window_bounds = array<i64: 1, 16, 128>}, {transform_indices = @transform_3, window_bounds = array<i64: 1, 16, 128>}, {pipeline_mode = #tpu.pipeline_mode<synchronous>, transform_indices = @transform_4, window_bounds = array<i64: 1, 128>}, {pipeline_mode = #tpu.pipeline_mode<synchronous>, transform_indices = @transform_5, window_bounds = array<i64: 1, 128>}, {pipeline_mode = #tpu.pipeline_mode<synchronous>, transform_indices = @transform_6, window_bounds = array<i64: 1, 128>}, {pipeline_mode = #tpu.pipeline_mode<synchronous>, transform_indices = @transform_7, window_bounds = array<i64: 1, 128>}, {pipeline_mode = #tpu.pipeline_mode<synchronous>, transform_indices = @transform_8, window_bounds = array<i64: 1, 128>}, {pipeline_mode = #tpu.pipeline_mode<synchronous>, transform_indices = @transform_9, window_bounds = array<i64: 1, 128>}, {pipeline_mode = #tpu.pipeline_mode<synchronous>, transform_indices = @transform_10, window_bounds = array<i64: 128, 128>}, {pipeline_mode = #tpu.pipeline_mode<synchronous>, transform_indices = @transform_11, window_bounds = array<i64: 1, 128>}, {pipeline_mode = #tpu.pipeline_mode<synchronous>, transform_indices = @transform_12, window_bounds = array<i64: 128, 256>}, {pipeline_mode = #tpu.pipeline_mode<synchronous>, transform_indices = @transform_13, window_bounds = array<i64: 1, 256>}, {pipeline_mode = #tpu.pipeline_mode<synchronous>, transform_indices = @transform_14, window_bounds = array<i64: 128, 128>}, {pipeline_mode = #tpu.pipeline_mode<synchronous>, transform_indices = @transform_15, window_bounds = array<i64: 1, 128>}, {pipeline_mode = #tpu.pipeline_mode<synchronous>, transform_indices = @transform_16, window_bounds = array<i64: 128, 256>}, {pipeline_mode = #tpu.pipeline_mode<synchronous>, transform_indices = @transform_17, window_bounds = array<i64: 1, 256>}, {pipeline_mode = #tpu.pipeline_mode<synchronous>, transform_indices = @transform_18, window_bounds = array<i64: 256, 128>}, {pipeline_mode = #tpu.pipeline_mode<synchronous>, transform_indices = @transform_19, window_bounds = array<i64: 1, 128>}, {transform_indices = @transform_20, window_bounds = array<i64: 1, 16, 128>}]} {
    %c0_i32 = arith.constant 0 : i32
    %0 = arith.cmpi eq, %arg2, %c0_i32 : i32
    %1 = arith.extui %0 : i1 to i32
    %c0_i32_0 = arith.constant 0 : i32
    %2 = arith.cmpi ne, %1, %c0_i32_0 : i32
    scf.if %2 {
      %c0_40 = arith.constant 0 : index
      %c0_41 = arith.constant 0 : index
      %c0_42 = arith.constant 0 : index
      %71 = vector.load %arg3[%c0_40, %c0_41, %c0_42] : memref<1x16x128xf32, #tpu.memory_space<vmem>>, vector<1x16x128xf32>
      %72 = vector.shape_cast %71 : vector<1x16x128xf32> to vector<16x128xf32>
      %c0_43 = arith.constant 0 : index
      %c0_44 = arith.constant 0 : index
      %c0_45 = arith.constant 0 : index
      %73 = vector.load %arg4[%c0_43, %c0_44, %c0_45] : memref<1x16x128xf32, #tpu.memory_space<vmem>>, vector<1x16x128xf32>
      %74 = vector.shape_cast %73 : vector<1x16x128xf32> to vector<16x128xf32>
      %c0_46 = arith.constant 0 : index
      %c0_47 = arith.constant 0 : index
      %75 = vector.load %arg7[%c0_46, %c0_47] : memref<1x128xf32, #tpu.memory_space<vmem>>, vector<1x128xf32>
      %c0_48 = arith.constant 0 : index
      %c0_49 = arith.constant 0 : index
      %76 = vector.load %arg8[%c0_48, %c0_49] : memref<1x128xf32, #tpu.memory_space<vmem>>, vector<1x128xf32>
      %cst_50 = arith.constant dense<0.000000e+00> : vector<16xf32>
      %77 = vector.multi_reduction <add>, %72, %cst_50 [1] : vector<16x128xf32> to vector<16xf32>
      %78 = vector.shape_cast %77 : vector<16xf32> to vector<16x1xf32>
      %cst_51 = arith.constant 1.280000e+02 : f32
      %79 = vector.broadcast %cst_51 : f32 to vector<16x1xf32>
      %80 = arith.divf %78, %79 : vector<16x1xf32>
      %81 = vector.broadcast %80 : vector<16x1xf32> to vector<16x128xf32>
      %82 = arith.subf %72, %81 : vector<16x128xf32>
      %83 = arith.mulf %82, %82 : vector<16x128xf32>
      %cst_52 = arith.constant dense<0.000000e+00> : vector<16xf32>
      %84 = vector.multi_reduction <add>, %83, %cst_52 [1] : vector<16x128xf32> to vector<16xf32>
      %85 = vector.shape_cast %84 : vector<16xf32> to vector<16x1xf32>
      %cst_53 = arith.constant 1.280000e+02 : f32
      %86 = vector.broadcast %cst_53 : f32 to vector<16x1xf32>
      %87 = arith.divf %85, %86 : vector<16x1xf32>
      %88 = vector.broadcast %80 : vector<16x1xf32> to vector<16x128xf32>
      %89 = arith.subf %72, %88 : vector<16x128xf32>
      %cst_54 = arith.constant 9.99999974E-6 : f32
      %90 = vector.broadcast %cst_54 : f32 to vector<16x1xf32>
      %91 = arith.addf %87, %90 : vector<16x1xf32>
      %92 = math.rsqrt %91 : vector<16x1xf32>
      %93 = vector.broadcast %92 : vector<16x1xf32> to vector<16x128xf32>
      %94 = arith.mulf %89, %93 : vector<16x128xf32>
      %95 = vector.broadcast %75 : vector<1x128xf32> to vector<16x128xf32>
      %96 = arith.mulf %94, %95 : vector<16x128xf32>
      %97 = vector.broadcast %76 : vector<1x128xf32> to vector<16x128xf32>
      %98 = arith.addf %96, %97 : vector<16x128xf32>
      %99 = arith.addf %98, %74 : vector<16x128xf32>
      %c0_55 = arith.constant 0 : index
      %c0_56 = arith.constant 0 : index
      %100 = vector.load %arg28[%c0_55, %c0_56] : memref<16x128xf32, #tpu.memory_space<vmem>>, vector<16x128xf32>
      tpu.vector_store %arg28[%c0_55, %c0_56], %99 {strides = array<i32>} : memref<16x128xf32, #tpu.memory_space<vmem>>, vector<16x128xf32>,
      %101 = arith.truncf %99 : vector<16x128xf32> to vector<16x128xbf16>
      %c0_57 = arith.constant 0 : index
      %c0_58 = arith.constant 0 : index
      %102 = vector.load %arg13[%c0_57, %c0_58] : memref<128x128xbf16, #tpu.memory_space<vmem>>, vector<128x128xbf16>
      %cst_59 = arith.constant dense<0.000000e+00> : vector<16x128xf32>
      %103 = tpu.matmul %101, %102, %cst_59 {dimension_numbers = #tpu.dot_dimension_numbers<[1], [0], [0], [1], [0, 0, 1, 1], [], []>} : vector<16x128xbf16>, vector<128x128xbf16>, vector<16x128xf32> -> vector<16x128xf32>
      %c0_60 = arith.constant 0 : index
      %c0_61 = arith.constant 0 : index
      %104 = vector.load %arg14[%c0_60, %c0_61] : memref<1x128xf32, #tpu.memory_space<vmem>>, vector<1x128xf32>
      %105 = vector.broadcast %104 : vector<1x128xf32> to vector<16x128xf32>
      %106 = arith.addf %103, %105 : vector<16x128xf32>
      %107 = arith.truncf %106 : vector<16x128xf32> to vector<16x128xbf16>
      %c0_62 = arith.constant 0 : index
      %c0_63 = arith.constant 0 : index
      %108 = vector.load %arg27[%c0_62, %c0_63] : memref<16x128xbf16, #tpu.memory_space<vmem>>, vector<16x128xbf16>
      tpu.vector_store %arg27[%c0_62, %c0_63], %107 {strides = array<i32>} : memref<16x128xbf16, #tpu.memory_space<vmem>>, vector<16x128xbf16>,
      %cst_64 = arith.constant 0xFF800000 : f32
      %109 = vector.broadcast %cst_64 : f32 to vector<16x1xf32>
      %c0_65 = arith.constant 0 : index
      %c0_66 = arith.constant 0 : index
      %110 = vector.load %arg24[%c0_65, %c0_66] : memref<16x1xf32, #tpu.memory_space<vmem>>, vector<16x1xf32>
      tpu.vector_store %arg24[%c0_65, %c0_66], %109 {strides = array<i32>} : memref<16x1xf32, #tpu.memory_space<vmem>>, vector<16x1xf32>,
      %cst_67 = arith.constant 0.000000e+00 : f32
      %111 = vector.broadcast %cst_67 : f32 to vector<16x1xf32>
      %c0_68 = arith.constant 0 : index
      %c0_69 = arith.constant 0 : index
      %112 = vector.load %arg25[%c0_68, %c0_69] : memref<16x1xf32, #tpu.memory_space<vmem>>, vector<16x1xf32>
      tpu.vector_store %arg25[%c0_68, %c0_69], %111 {strides = array<i32>} : memref<16x1xf32, #tpu.memory_space<vmem>>, vector<16x1xf32>,
      %cst_70 = arith.constant 0.000000e+00 : f32
      %113 = vector.broadcast %cst_70 : f32 to vector<16x128xf32>
      %c0_71 = arith.constant 0 : index
      %c0_72 = arith.constant 0 : index
      %114 = vector.load %arg26[%c0_71, %c0_72] : memref<16x128xf32, #tpu.memory_space<vmem>>, vector<16x128xf32>
      tpu.vector_store %arg26[%c0_71, %c0_72], %113 {strides = array<i32>} : memref<16x128xf32, #tpu.memory_space<vmem>>, vector<16x128xf32>,
    } else {
    }
    %c0 = arith.constant 0 : index
    %c0_1 = arith.constant 0 : index
    %c0_2 = arith.constant 0 : index
    %3 = vector.load %arg5[%c0, %c0_1, %c0_2] : memref<1x16x128xf32, #tpu.memory_space<vmem>>, vector<1x16x128xf32>
    %4 = vector.shape_cast %3 : vector<1x16x128xf32> to vector<16x128xf32>
    %c0_3 = arith.constant 0 : index
    %c0_4 = arith.constant 0 : index
    %c0_5 = arith.constant 0 : index
    %5 = vector.load %arg6[%c0_3, %c0_4, %c0_5] : memref<1x16x128xf32, #tpu.memory_space<vmem>>, vector<1x16x128xf32>
    %6 = vector.shape_cast %5 : vector<1x16x128xf32> to vector<16x128xf32>
    %c0_6 = arith.constant 0 : index
    %c0_7 = arith.constant 0 : index
    %7 = vector.load %arg7[%c0_6, %c0_7] : memref<1x128xf32, #tpu.memory_space<vmem>>, vector<1x128xf32>
    %c0_8 = arith.constant 0 : index
    %c0_9 = arith.constant 0 : index
    %8 = vector.load %arg8[%c0_8, %c0_9] : memref<1x128xf32, #tpu.memory_space<vmem>>, vector<1x128xf32>
    %cst = arith.constant dense<0.000000e+00> : vector<16xf32>
    %9 = vector.multi_reduction <add>, %4, %cst [1] : vector<16x128xf32> to vector<16xf32>
    %10 = vector.shape_cast %9 : vector<16xf32> to vector<16x1xf32>
    %cst_10 = arith.constant 1.280000e+02 : f32
    %11 = vector.broadcast %cst_10 : f32 to vector<16x1xf32>
    %12 = arith.divf %10, %11 : vector<16x1xf32>
    %13 = vector.broadcast %12 : vector<16x1xf32> to vector<16x128xf32>
    %14 = arith.subf %4, %13 : vector<16x128xf32>
    %15 = arith.mulf %14, %14 : vector<16x128xf32>
    %cst_11 = arith.constant dense<0.000000e+00> : vector<16xf32>
    %16 = vector.multi_reduction <add>, %15, %cst_11 [1] : vector<16x128xf32> to vector<16xf32>
    %17 = vector.shape_cast %16 : vector<16xf32> to vector<16x1xf32>
    %cst_12 = arith.constant 1.280000e+02 : f32
    %18 = vector.broadcast %cst_12 : f32 to vector<16x1xf32>
    %19 = arith.divf %17, %18 : vector<16x1xf32>
    %20 = vector.broadcast %12 : vector<16x1xf32> to vector<16x128xf32>
    %21 = arith.subf %4, %20 : vector<16x128xf32>
    %cst_13 = arith.constant 9.99999974E-6 : f32
    %22 = vector.broadcast %cst_13 : f32 to vector<16x1xf32>
    %23 = arith.addf %19, %22 : vector<16x1xf32>
    %24 = math.rsqrt %23 : vector<16x1xf32>
    %25 = vector.broadcast %24 : vector<16x1xf32> to vector<16x128xf32>
    %26 = arith.mulf %21, %25 : vector<16x128xf32>
    %27 = vector.broadcast %7 : vector<1x128xf32> to vector<16x128xf32>
    %28 = arith.mulf %26, %27 : vector<16x128xf32>
    %29 = vector.broadcast %8 : vector<1x128xf32> to vector<16x128xf32>
    %30 = arith.addf %28, %29 : vector<16x128xf32>
    %31 = arith.addf %30, %6 : vector<16x128xf32>
    %32 = arith.truncf %31 : vector<16x128xf32> to vector<16x128xbf16>
    %c0_14 = arith.constant 0 : index
    %c0_15 = arith.constant 0 : index
    %33 = vector.load %arg15[%c0_14, %c0_15] : memref<128x256xbf16, #tpu.memory_space<vmem>>, vector<128x256xbf16>
    %cst_16 = arith.constant dense<0.000000e+00> : vector<16x256xf32>
    %34 = tpu.matmul %32, %33, %cst_16 {dimension_numbers = #tpu.dot_dimension_numbers<[1], [0], [0], [1], [0, 0, 1, 1], [], []>} : vector<16x128xbf16>, vector<128x256xbf16>, vector<16x256xf32> -> vector<16x256xf32>
    %c0_17 = arith.constant 0 : index
    %c0_18 = arith.constant 0 : index
    %35 = vector.load %arg16[%c0_17, %c0_18] : memref<1x256xf32, #tpu.memory_space<vmem>>, vector<1x256xf32>
    %36 = vector.broadcast %35 : vector<1x256xf32> to vector<16x256xf32>
    %37 = arith.addf %34, %36 : vector<16x256xf32>
    %38 = vector.extract_strided_slice %37 {offsets = [0, 0], sizes = [16, 128], strides = [1, 1]} : vector<16x256xf32> to vector<16x128xf32>
    %39 = arith.truncf %38 : vector<16x128xf32> to vector<16x128xbf16>
    %40 = vector.extract_strided_slice %37 {offsets = [0, 128], sizes = [16, 128], strides = [1, 1]} : vector<16x256xf32> to vector<16x128xf32>
    %41 = arith.truncf %40 : vector<16x128xf32> to vector<16x128xbf16>
    %c0_19 = arith.constant 0 : index
    %c0_20 = arith.constant 0 : index
    %42 = vector.load %arg27[%c0_19, %c0_20] : memref<16x128xbf16, #tpu.memory_space<vmem>>, vector<16x128xbf16>
    %cst_21 = arith.constant dense<0.000000e+00> : vector<16x16xf32>
    %43 = tpu.matmul %42, %39, %cst_21 {dimension_numbers = #tpu.dot_dimension_numbers<[1], [1], [0], [0], [0, 0, 1, 0], [], []>} : vector<16x128xbf16>, vector<16x128xbf16>, vector<16x16xf32> -> vector<16x16xf32>
    %c0_22 = arith.constant 0 : index
    %c0_23 = arith.constant 0 : index
    %44 = vector.load %arg24[%c0_22, %c0_23] : memref<16x1xf32, #tpu.memory_space<vmem>>, vector<16x1xf32>
    %cst_24 = arith.constant dense<0xFF800000> : vector<16xf32>
    %45 = vector.multi_reduction <maximumf>, %43, %cst_24 [1] : vector<16x16xf32> to vector<16xf32>
    %46 = vector.shape_cast %45 : vector<16xf32> to vector<16x1xf32>
    %47 = arith.maximumf %44, %46 : vector<16x1xf32>
    %c0_25 = arith.constant 0 : index
    %c0_26 = arith.constant 0 : index
    %48 = vector.load %arg24[%c0_25, %c0_26] : memref<16x1xf32, #tpu.memory_space<vmem>>, vector<16x1xf32>
    %49 = arith.subf %48, %47 : vector<16x1xf32>
    %50 = math.exp %49 : vector<16x1xf32>
    %51 = vector.broadcast %47 : vector<16x1xf32> to vector<16x16xf32>
    %52 = arith.subf %43, %51 : vector<16x16xf32>
    %53 = math.exp %52 : vector<16x16xf32>
    %c0_27 = arith.constant 0 : index
    %c0_28 = arith.constant 0 : index
    %54 = vector.load %arg25[%c0_27, %c0_28] : memref<16x1xf32, #tpu.memory_space<vmem>>, vector<16x1xf32>
    %55 = arith.mulf %50, %54 : vector<16x1xf32>
    %cst_29 = arith.constant dense<0.000000e+00> : vector<16xf32>
    %56 = vector.multi_reduction <add>, %53, %cst_29 [1] : vector<16x16xf32> to vector<16xf32>
    %57 = vector.shape_cast %56 : vector<16xf32> to vector<16x1xf32>
    %58 = arith.addf %55, %57 : vector<16x1xf32>
    %c0_30 = arith.constant 0 : index
    %c0_31 = arith.constant 0 : index
    %59 = vector.load %arg25[%c0_30, %c0_31] : memref<16x1xf32, #tpu.memory_space<vmem>>, vector<16x1xf32>
    tpu.vector_store %arg25[%c0_30, %c0_31], %58 {strides = array<i32>} : memref<16x1xf32, #tpu.memory_space<vmem>>, vector<16x1xf32>,
    %c0_32 = arith.constant 0 : index
    %c0_33 = arith.constant 0 : index
    %60 = vector.load %arg26[%c0_32, %c0_33] : memref<16x128xf32, #tpu.memory_space<vmem>>, vector<16x128xf32>
    %61 = vector.broadcast %50 : vector<16x1xf32> to vector<16x128xf32>
    %62 = arith.mulf %61, %60 : vector<16x128xf32>
    %63 = arith.truncf %53 : vector<16x16xf32> to vector<16x16xbf16>
    %cst_34 = arith.constant dense<0.000000e+00> : vector<16x128xf32>
    %64 = tpu.matmul %63, %41, %cst_34 {dimension_numbers = #tpu.dot_dimension_numbers<[1], [0], [0], [1], [0, 0, 1, 1], [], []>} : vector<16x16xbf16>, vector<16x128xbf16>, vector<16x128xf32> -> vector<16x128xf32>
    %65 = arith.addf %62, %64 : vector<16x128xf32>
    %c0_35 = arith.constant 0 : index
    %c0_36 = arith.constant 0 : index
    %66 = vector.load %arg26[%c0_35, %c0_36] : memref<16x128xf32, #tpu.memory_space<vmem>>, vector<16x128xf32>
    tpu.vector_store %arg26[%c0_35, %c0_36], %65 {strides = array<i32>} : memref<16x128xf32, #tpu.memory_space<vmem>>, vector<16x128xf32>,
    %c0_37 = arith.constant 0 : index
    %c0_38 = arith.constant 0 : index
    %67 = vector.load %arg24[%c0_37, %c0_38] : memref<16x1xf32, #tpu.memory_space<vmem>>, vector<16x1xf32>
    tpu.vector_store %arg24[%c0_37, %c0_38], %47 {strides = array<i32>} : memref<16x1xf32, #tpu.memory_space<vmem>>, vector<16x1xf32>,
    %c1_i32 = arith.constant 1 : i32
    %68 = arith.cmpi eq, %arg2, %c1_i32 : i32
    %69 = arith.extui %68 : i1 to i32
    %c0_i32_39 = arith.constant 0 : i32
    %70 = arith.cmpi ne, %69, %c0_i32_39 : i32
    scf.if %70 {
      %c0_40 = arith.constant 0 : index
      %c0_41 = arith.constant 0 : index
      %71 = vector.load %arg26[%c0_40, %c0_41] : memref<16x128xf32, #tpu.memory_space<vmem>>, vector<16x128xf32>
      %c0_42 = arith.constant 0 : index
      %c0_43 = arith.constant 0 : index
      %72 = vector.load %arg25[%c0_42, %c0_43] : memref<16x1xf32, #tpu.memory_space<vmem>>, vector<16x1xf32>
      %73 = tpu.reciprocal %72 {approx = true} : vector<16x1xf32> -> vector<16x1xf32>
      %74 = vector.broadcast %73 : vector<16x1xf32> to vector<16x128xf32>
      %75 = arith.mulf %71, %74 : vector<16x128xf32>
      %76 = arith.truncf %75 : vector<16x128xf32> to vector<16x128xbf16>
      %c0_44 = arith.constant 0 : index
      %c0_45 = arith.constant 0 : index
      %77 = vector.load %arg17[%c0_44, %c0_45] : memref<128x128xbf16, #tpu.memory_space<vmem>>, vector<128x128xbf16>
      %cst_46 = arith.constant dense<0.000000e+00> : vector<16x128xf32>
      %78 = tpu.matmul %76, %77, %cst_46 {dimension_numbers = #tpu.dot_dimension_numbers<[1], [0], [0], [1], [0, 0, 1, 1], [], []>} : vector<16x128xbf16>, vector<128x128xbf16>, vector<16x128xf32> -> vector<16x128xf32>
      %c0_47 = arith.constant 0 : index
      %c0_48 = arith.constant 0 : index
      %79 = vector.load %arg18[%c0_47, %c0_48] : memref<1x128xf32, #tpu.memory_space<vmem>>, vector<1x128xf32>
      %80 = vector.broadcast %79 : vector<1x128xf32> to vector<16x128xf32>
      %81 = arith.addf %78, %80 : vector<16x128xf32>
      %c0_49 = arith.constant 0 : index
      %c0_50 = arith.constant 0 : index
      %c0_51 = arith.constant 0 : index
      %82 = vector.load %arg3[%c0_49, %c0_50, %c0_51] : memref<1x16x128xf32, #tpu.memory_space<vmem>>, vector<1x16x128xf32>
      %83 = vector.shape_cast %82 : vector<1x16x128xf32> to vector<16x128xf32>
      %c0_52 = arith.constant 0 : index
      %c0_53 = arith.constant 0 : index
      %84 = vector.load %arg28[%c0_52, %c0_53] : memref<16x128xf32, #tpu.memory_space<vmem>>, vector<16x128xf32>
      %85 = arith.addf %83, %84 : vector<16x128xf32>
      %86 = arith.addf %85, %81 : vector<16x128xf32>
      %c0_54 = arith.constant 0 : index
      %c0_55 = arith.constant 0 : index
      %87 = vector.load %arg9[%c0_54, %c0_55] : memref<1x128xf32, #tpu.memory_space<vmem>>, vector<1x128xf32>
      %c0_56 = arith.constant 0 : index
      %c0_57 = arith.constant 0 : index
      %88 = vector.load %arg10[%c0_56, %c0_57] : memref<1x128xf32, #tpu.memory_space<vmem>>, vector<1x128xf32>
      %cst_58 = arith.constant dense<0.000000e+00> : vector<16xf32>
      %89 = vector.multi_reduction <add>, %86, %cst_58 [1] : vector<16x128xf32> to vector<16xf32>
      %90 = vector.shape_cast %89 : vector<16xf32> to vector<16x1xf32>
      %cst_59 = arith.constant 1.280000e+02 : f32
      %91 = vector.broadcast %cst_59 : f32 to vector<16x1xf32>
      %92 = arith.divf %90, %91 : vector<16x1xf32>
      %93 = vector.broadcast %92 : vector<16x1xf32> to vector<16x128xf32>
      %94 = arith.subf %86, %93 : vector<16x128xf32>
      %95 = arith.mulf %94, %94 : vector<16x128xf32>
      %cst_60 = arith.constant dense<0.000000e+00> : vector<16xf32>
      %96 = vector.multi_reduction <add>, %95, %cst_60 [1] : vector<16x128xf32> to vector<16xf32>
      %97 = vector.shape_cast %96 : vector<16xf32> to vector<16x1xf32>
      %cst_61 = arith.constant 1.280000e+02 : f32
      %98 = vector.broadcast %cst_61 : f32 to vector<16x1xf32>
      %99 = arith.divf %97, %98 : vector<16x1xf32>
      %100 = vector.broadcast %92 : vector<16x1xf32> to vector<16x128xf32>
      %101 = arith.subf %86, %100 : vector<16x128xf32>
      %cst_62 = arith.constant 9.99999974E-6 : f32
      %102 = vector.broadcast %cst_62 : f32 to vector<16x1xf32>
      %103 = arith.addf %99, %102 : vector<16x1xf32>
      %104 = math.rsqrt %103 : vector<16x1xf32>
      %105 = vector.broadcast %104 : vector<16x1xf32> to vector<16x128xf32>
      %106 = arith.mulf %101, %105 : vector<16x128xf32>
      %107 = vector.broadcast %87 : vector<1x128xf32> to vector<16x128xf32>
      %108 = arith.mulf %106, %107 : vector<16x128xf32>
      %109 = vector.broadcast %88 : vector<1x128xf32> to vector<16x128xf32>
      %110 = arith.addf %108, %109 : vector<16x128xf32>
      %111 = arith.truncf %110 : vector<16x128xf32> to vector<16x128xbf16>
      %c0_63 = arith.constant 0 : index
      %c0_64 = arith.constant 0 : index
      %112 = vector.load %arg19[%c0_63, %c0_64] : memref<128x256xbf16, #tpu.memory_space<vmem>>, vector<128x256xbf16>
      %cst_65 = arith.constant dense<0.000000e+00> : vector<16x256xf32>
      %113 = tpu.matmul %111, %112, %cst_65 {dimension_numbers = #tpu.dot_dimension_numbers<[1], [0], [0], [1], [0, 0, 1, 1], [], []>} : vector<16x128xbf16>, vector<128x256xbf16>, vector<16x256xf32> -> vector<16x256xf32>
      %c0_66 = arith.constant 0 : index
      %c0_67 = arith.constant 0 : index
      %114 = vector.load %arg20[%c0_66, %c0_67] : memref<1x256xf32, #tpu.memory_space<vmem>>, vector<1x256xf32>
      %115 = vector.broadcast %114 : vector<1x256xf32> to vector<16x256xf32>
      %116 = arith.addf %113, %115 : vector<16x256xf32>
      %cst_68 = arith.constant 0.000000e+00 : f32
      %117 = vector.broadcast %cst_68 : f32 to vector<16x256xf32>
      %118 = arith.maximumf %116, %117 : vector<16x256xf32>
      %119 = arith.truncf %118 : vector<16x256xf32> to vector<16x256xbf16>
      %c0_69 = arith.constant 0 : index
      %c0_70 = arith.constant 0 : index
      %120 = vector.load %arg21[%c0_69, %c0_70] : memref<256x128xbf16, #tpu.memory_space<vmem>>, vector<256x128xbf16>
      %cst_71 = arith.constant dense<0.000000e+00> : vector<16x128xf32>
      %121 = tpu.matmul %119, %120, %cst_71 {dimension_numbers = #tpu.dot_dimension_numbers<[1], [0], [0], [1], [0, 0, 1, 1], [], []>} : vector<16x256xbf16>, vector<256x128xbf16>, vector<16x128xf32> -> vector<16x128xf32>
      %c0_72 = arith.constant 0 : index
      %c0_73 = arith.constant 0 : index
      %122 = vector.load %arg22[%c0_72, %c0_73] : memref<1x128xf32, #tpu.memory_space<vmem>>, vector<1x128xf32>
      %123 = vector.broadcast %122 : vector<1x128xf32> to vector<16x128xf32>
      %124 = arith.addf %121, %123 : vector<16x128xf32>
      %125 = arith.addf %86, %124 : vector<16x128xf32>
      %c0_74 = arith.constant 0 : index
      %c0_75 = arith.constant 0 : index
      %126 = vector.load %arg11[%c0_74, %c0_75] : memref<1x128xf32, #tpu.memory_space<vmem>>, vector<1x128xf32>
      %c0_76 = arith.constant 0 : index
      %c0_77 = arith.constant 0 : index
      %127 = vector.load %arg12[%c0_76, %c0_77] : memref<1x128xf32, #tpu.memory_space<vmem>>, vector<1x128xf32>
      %cst_78 = arith.constant dense<0.000000e+00> : vector<16xf32>
      %128 = vector.multi_reduction <add>, %125, %cst_78 [1] : vector<16x128xf32> to vector<16xf32>
      %129 = vector.shape_cast %128 : vector<16xf32> to vector<16x1xf32>
      %cst_79 = arith.constant 1.280000e+02 : f32
      %130 = vector.broadcast %cst_79 : f32 to vector<16x1xf32>
      %131 = arith.divf %129, %130 : vector<16x1xf32>
      %132 = vector.broadcast %131 : vector<16x1xf32> to vector<16x128xf32>
      %133 = arith.subf %125, %132 : vector<16x128xf32>
      %134 = arith.mulf %133, %133 : vector<16x128xf32>
      %cst_80 = arith.constant dense<0.000000e+00> : vector<16xf32>
      %135 = vector.multi_reduction <add>, %134, %cst_80 [1] : vector<16x128xf32> to vector<16xf32>
      %136 = vector.shape_cast %135 : vector<16xf32> to vector<16x1xf32>
      %cst_81 = arith.constant 1.280000e+02 : f32
      %137 = vector.broadcast %cst_81 : f32 to vector<16x1xf32>
      %138 = arith.divf %136, %137 : vector<16x1xf32>
      %139 = vector.broadcast %131 : vector<16x1xf32> to vector<16x128xf32>
      %140 = arith.subf %125, %139 : vector<16x128xf32>
      %cst_82 = arith.constant 9.99999974E-6 : f32
      %141 = vector.broadcast %cst_82 : f32 to vector<16x1xf32>
      %142 = arith.addf %138, %141 : vector<16x1xf32>
      %143 = math.rsqrt %142 : vector<16x1xf32>
      %144 = vector.broadcast %143 : vector<16x1xf32> to vector<16x128xf32>
      %145 = arith.mulf %140, %144 : vector<16x128xf32>
      %146 = vector.broadcast %126 : vector<1x128xf32> to vector<16x128xf32>
      %147 = arith.mulf %145, %146 : vector<16x128xf32>
      %148 = vector.broadcast %127 : vector<1x128xf32> to vector<16x128xf32>
      %149 = arith.addf %147, %148 : vector<16x128xf32>
      %c0_83 = arith.constant 0 : index
      %c0_84 = arith.constant 0 : index
      %c0_85 = arith.constant 0 : index
      %150 = vector.load %arg23[%c0_83, %c0_84, %c0_85] : memref<1x16x128xf32, #tpu.memory_space<vmem>>, vector<1x16x128xf32>
      %151 = vector.shape_cast %150 : vector<1x16x128xf32> to vector<16x128xf32>
      %152 = vector.shape_cast %149 : vector<16x128xf32> to vector<1x16x128xf32>
      tpu.vector_store %arg23[%c0_83, %c0_84, %c0_85], %152 {strides = array<i32>} : memref<1x16x128xf32, #tpu.memory_space<vmem>>, vector<1x16x128xf32>,
    } else {
    }
    return
  }
  func.func @transform_0(%arg0: i32, %arg1: i32, %arg2: i32) -> (i32, i32, i32) {
    %c0_i32 = arith.constant 0 : i32
    %c0_i32_0 = arith.constant 0 : i32
    return %arg0, %arg1, %c0_i32 : i32, i32, i32
  }
  func.func @transform_1(%arg0: i32, %arg1: i32, %arg2: i32) -> (i32, i32, i32) {
    %c0_i32 = arith.constant 0 : i32
    %c0_i32_0 = arith.constant 0 : i32
    return %arg0, %arg1, %c0_i32 : i32, i32, i32
  }
  func.func @transform_2(%arg0: i32, %arg1: i32, %arg2: i32) -> (i32, i32, i32) {
    %c0_i32 = arith.constant 0 : i32
    %c0_i32_0 = arith.constant 0 : i32
    return %arg0, %arg2, %c0_i32 : i32, i32, i32
  }
  func.func @transform_3(%arg0: i32, %arg1: i32, %arg2: i32) -> (i32, i32, i32) {
    %c0_i32 = arith.constant 0 : i32
    %c0_i32_0 = arith.constant 0 : i32
    return %arg0, %arg2, %c0_i32 : i32, i32, i32
  }
  func.func @transform_4(%arg0: i32, %arg1: i32, %arg2: i32) -> (i32, i32) {
    %c0_i32 = arith.constant 0 : i32
    %c0_i32_0 = arith.constant 0 : i32
    %c0_i32_1 = arith.constant 0 : i32
    return %c0_i32, %c0_i32_0 : i32, i32
  }
  func.func @transform_5(%arg0: i32, %arg1: i32, %arg2: i32) -> (i32, i32) {
    %c0_i32 = arith.constant 0 : i32
    %c0_i32_0 = arith.constant 0 : i32
    %c0_i32_1 = arith.constant 0 : i32
    return %c0_i32, %c0_i32_0 : i32, i32
  }
  func.func @transform_6(%arg0: i32, %arg1: i32, %arg2: i32) -> (i32, i32) {
    %c0_i32 = arith.constant 0 : i32
    %c0_i32_0 = arith.constant 0 : i32
    %c0_i32_1 = arith.constant 0 : i32
    return %c0_i32, %c0_i32_0 : i32, i32
  }
  func.func @transform_7(%arg0: i32, %arg1: i32, %arg2: i32) -> (i32, i32) {
    %c0_i32 = arith.constant 0 : i32
    %c0_i32_0 = arith.constant 0 : i32
    %c0_i32_1 = arith.constant 0 : i32
    return %c0_i32, %c0_i32_0 : i32, i32
  }
  func.func @transform_8(%arg0: i32, %arg1: i32, %arg2: i32) -> (i32, i32) {
    %c0_i32 = arith.constant 0 : i32
    %c0_i32_0 = arith.constant 0 : i32
    %c0_i32_1 = arith.constant 0 : i32
    return %c0_i32, %c0_i32_0 : i32, i32
  }
  func.func @transform_9(%arg0: i32, %arg1: i32, %arg2: i32) -> (i32, i32) {
    %c0_i32 = arith.constant 0 : i32
    %c0_i32_0 = arith.constant 0 : i32
    %c0_i32_1 = arith.constant 0 : i32
    return %c0_i32, %c0_i32_0 : i32, i32
  }
  func.func @transform_10(%arg0: i32, %arg1: i32, %arg2: i32) -> (i32, i32) {
    %c0_i32 = arith.constant 0 : i32
    %c0_i32_0 = arith.constant 0 : i32
    %c0_i32_1 = arith.constant 0 : i32
    return %c0_i32, %c0_i32_0 : i32, i32
  }
  func.func @transform_11(%arg0: i32, %arg1: i32, %arg2: i32) -> (i32, i32) {
    %c0_i32 = arith.constant 0 : i32
    %c0_i32_0 = arith.constant 0 : i32
    %c0_i32_1 = arith.constant 0 : i32
    return %c0_i32, %c0_i32_0 : i32, i32
  }
  func.func @transform_12(%arg0: i32, %arg1: i32, %arg2: i32) -> (i32, i32) {
    %c0_i32 = arith.constant 0 : i32
    %c0_i32_0 = arith.constant 0 : i32
    %c0_i32_1 = arith.constant 0 : i32
    return %c0_i32, %c0_i32_0 : i32, i32
  }
  func.func @transform_13(%arg0: i32, %arg1: i32, %arg2: i32) -> (i32, i32) {
    %c0_i32 = arith.constant 0 : i32
    %c0_i32_0 = arith.constant 0 : i32
    %c0_i32_1 = arith.constant 0 : i32
    return %c0_i32, %c0_i32_0 : i32, i32
  }
  func.func @transform_14(%arg0: i32, %arg1: i32, %arg2: i32) -> (i32, i32) {
    %c0_i32 = arith.constant 0 : i32
    %c0_i32_0 = arith.constant 0 : i32
    %c0_i32_1 = arith.constant 0 : i32
    return %c0_i32, %c0_i32_0 : i32, i32
  }
  func.func @transform_15(%arg0: i32, %arg1: i32, %arg2: i32) -> (i32, i32) {
    %c0_i32 = arith.constant 0 : i32
    %c0_i32_0 = arith.constant 0 : i32
    %c0_i32_1 = arith.constant 0 : i32
    return %c0_i32, %c0_i32_0 : i32, i32
  }
  func.func @transform_16(%arg0: i32, %arg1: i32, %arg2: i32) -> (i32, i32) {
    %c0_i32 = arith.constant 0 : i32
    %c0_i32_0 = arith.constant 0 : i32
    %c0_i32_1 = arith.constant 0 : i32
    return %c0_i32, %c0_i32_0 : i32, i32
  }
  func.func @transform_17(%arg0: i32, %arg1: i32, %arg2: i32) -> (i32, i32) {
    %c0_i32 = arith.constant 0 : i32
    %c0_i32_0 = arith.constant 0 : i32
    %c0_i32_1 = arith.constant 0 : i32
    return %c0_i32, %c0_i32_0 : i32, i32
  }
  func.func @transform_18(%arg0: i32, %arg1: i32, %arg2: i32) -> (i32, i32) {
    %c0_i32 = arith.constant 0 : i32
    %c0_i32_0 = arith.constant 0 : i32
    %c0_i32_1 = arith.constant 0 : i32
    return %c0_i32, %c0_i32_0 : i32, i32
  }
  func.func @transform_19(%arg0: i32, %arg1: i32, %arg2: i32) -> (i32, i32) {
    %c0_i32 = arith.constant 0 : i32
    %c0_i32_0 = arith.constant 0 : i32
    %c0_i32_1 = arith.constant 0 : i32
    return %c0_i32, %c0_i32_0 : i32, i32
  }
  func.func @transform_20(%arg0: i32, %arg1: i32, %arg2: i32) -> (i32, i32, i32) {
    %c0_i32 = arith.constant 0 : i32
    %c0_i32_0 = arith.constant 0 : i32
    return %arg0, %arg1, %c0_i32 : i32, i32, i32
  }
}

</mosaic_0001>

<llo_original>
// kernel: _mfuser_call.1
$region0: #{_mfuser_call.1}
  #allocation0 [shape = 'u32[]', space=smem, size = 0x4, offset = 0x4, fixed_abs, tag = 'smem constant byte address 0x4 - core index']
  #allocation1 [shape = 'u32[144,128]{1,0:T(1,128)}', space=vmem, size = 0x12000, scoped, tag = 'internal scratch']
  #allocation2 [shape = 'f32[16,1]{1,0:T(8,128)}', space=vmem, size = 0x2000, scoped, tag = 'scratch operand']
  #allocation3 [shape = 'f32[16,1]{1,0:T(8,128)}', space=vmem, size = 0x2000, scoped, tag = 'scratch operand']
  #allocation4 [shape = 'f32[16,128]{1,0:T(8,128)}', space=vmem, size = 0x2000, scoped, tag = 'scratch operand']
  #allocation5 [shape = 'bf16[16,128]{1,0:T(8,128)(2,1)}', space=vmem, size = 0x1000, scoped, tag = 'scratch operand']
  #allocation6 [shape = 'f32[16,128]{1,0:T(8,128)}', space=vmem, size = 0x2000, scoped, tag = 'scratch operand']
  %s0 = inlined_call_operand.vmem [shape: f32[2,32,128], index: 0, kind: input, shape index: {}, may-alias: {0,2}]
  %s1 = inlined_call_operand.vmem [shape: f32[2,32,128], index: 1, kind: input, shape index: {}, may-alias: {1,3}]
  %s2 = inlined_call_operand.vmem [shape: f32[2,32,128], index: 2, kind: input, shape index: {}, may-alias: {0,2}]
  %s3 = inlined_call_operand.vmem [shape: f32[2,32,128], index: 3, kind: input, shape index: {}, may-alias: {1,3}]
  %s4 = inlined_call_operand.vmem [shape: f32[1,128], index: 4, kind: input, shape index: {}]
  %s5 = inlined_call_operand.vmem [shape: f32[1,128], index: 5, kind: input, shape index: {}]
  %s6 = inlined_call_operand.vmem [shape: f32[1,128], index: 6, kind: input, shape index: {}]
  %s7 = inlined_call_operand.hbm [shape: f32[1,128], index: 7, kind: input, shape index: {}]
  %s8 = inlined_call_operand.vmem [shape: f32[1,128], index: 8, kind: input, shape index: {}]
  %s9 = inlined_call_operand.vmem [shape: f32[1,128], index: 9, kind: input, shape index: {}]
  %s10 = inlined_call_operand.hbm [shape: bf16[128,128], index: 10, kind: input, shape index: {}]
  %s11 = inlined_call_operand.vmem [shape: f32[1,128], index: 11, kind: input, shape index: {}]
  %s12 = inlined_call_operand.vmem [shape: bf16[128,256], index: 12, kind: input, shape index: {}]
  %s13 = inlined_call_operand.vmem [shape: f32[1,256], index: 13, kind: input, shape index: {}]
  %s14 = inlined_call_operand.hbm [shape: bf16[128,128], index: 14, kind: input, shape index: {}]
  %s15 = inlined_call_operand.vmem [shape: f32[1,128], index: 15, kind: input, shape index: {}]
  %s16 = inlined_call_operand.vmem [shape: bf16[128,256], index: 16, kind: input, shape index: {}]
  %s17 = inlined_call_operand.vmem [shape: f32[1,256], index: 17, kind: input, shape index: {}]
  %s18 = inlined_call_operand.hbm [shape: bf16[256,128], index: 18, kind: input, shape index: {}]
  %s19 = inlined_call_operand.vmem [shape: f32[1,128], index: 19, kind: input, shape index: {}]
  %s20 = inlined_call_operand.vmem [shape: f32[2,32,128], index: 20, kind: output, shape index: {}]
  %s21 = sld [smem:[#allocation0]]
  $region137: #{_mfuser_call.1} parent=0
    _
  %s23 = ssub.s32 1, %s21
  %s24 = scalar_select 0, %s23, %s21
  $region1: #{_mfuser_call.1} parent=0
    #allocation7 [shape = 'u8[512]{0}', space=vmem, size = 0x400, scoped, tag = 'input window, operand 7, single buffered']
    #allocation8 [shape = 's32[2]{0}', space=sflag, size = 0x8, scoped, tag = 'scoped memory for _mfuser_call.1']
    #allocation9 [shape = 'u8[32768]{0}', space=vmem, size = 0x8000, scoped, tag = 'input window, operand 10, single buffered']
    #allocation10 [shape = 's32[1]{0}', space=sflag, size = 0x4, scoped, tag = 'scoped memory for _mfuser_call.1']
    #allocation11 [shape = 'u8[32768]{0}', space=vmem, size = 0x8000, scoped, tag = 'input window, operand 14, single buffered']
    #allocation12 [shape = 'u8[65536]{0}', space=vmem, size = 0x10000, scoped, tag = 'input window, operand 18, single buffered']
    #allocation13 [shape = 's32[1]{0}', space=sflag, size = 0x4, scoped, tag = 'scoped memory for _mfuser_call.1']
    %25 = vsyncpa [#allocation8], 0
    %26 = vsyncpa [#allocation10], 0
    %27 = vsyncpa [#allocation13], 0
    loop: start=0, step=1, limit=10
    $region2: #{_mfuser_call.1} parent=1 // loop_pre_header
      _
    $region3: #{_mfuser_call.1} parent=1 // loop_header
      %s29 = sphi 0, %s33
      %p30 = scmp.ge.s32.totalorder %s29, 10
      %s36 = sphi 0, %s55
      %s37 = sphi 0, %s51
      %s38 = sphi 0, %s47
      %s39 = sphi 0, %s36
      %s40 = sphi 0, %s37
      %s41 = sphi 0, %s38
      %s42 = sphi 0, %s39
      %s43 = sphi 0, %s40
      %s44 = sphi 0, %s41
      %s60 = sphi 0, %s62
      %s63 = sphi 0, %s60
      %s64 = sphi 0, %s63
      %s80 = sphi 0, %s64
      %s88 = sphi 0, %s90
      %s91 = sphi 0, %s88
      %s92 = sphi 0, %s91
      %s108 = sphi 0, %s92
      %s116 = sphi 0, %s118
      %s119 = sphi 0, %s116
      %s120 = sphi 0, %s119
      %s136 = sphi 0, %s120
      %s144 = sphi 0, %s146
      %s147 = sphi 0, %s144
      %s148 = sphi 0, %s147
      %s164 = sphi 0, %s148
      %s168 = sphi 0, %s168
      %s170 = sphi 0, %s168
      %s171 = sphi 0, %s170
      %s185 = sphi 0, %s171
      %s189 = sphi 0, %s189
      %s191 = sphi 0, %s189
      %s192 = sphi 0, %s191
      %s206 = sphi 0, %s192
      %s210 = sphi 0, %s210
      %s212 = sphi 0, %s210
      %s213 = sphi 0, %s212
      %s227 = sphi 0, %s213
      %s231 = sphi 0, %s231
      %s233 = sphi 0, %s231
      %s234 = sphi 0, %s233
      %s248 = sphi 0, %s234
      %s252 = sphi 0, %s252
      %s254 = sphi 0, %s252
      %s255 = sphi 0, %s254
      %s269 = sphi 0, %s255
      %s273 = sphi 0, %s273
      %s275 = sphi 0, %s273
      %s276 = sphi 0, %s275
      %s290 = sphi 0, %s276
      %s294 = sphi 0, %s294
      %s296 = sphi 0, %s294
      %s297 = sphi 0, %s296
      %s311 = sphi 0, %s297
      %s315 = sphi 0, %s315
      %s317 = sphi 0, %s315
      %s318 = sphi 0, %s317
      %s332 = sphi 0, %s318
      %s336 = sphi 0, %s336
      %s338 = sphi 0, %s336
      %s339 = sphi 0, %s338
      %s353 = sphi 0, %s339
      %s357 = sphi 0, %s357
      %s359 = sphi 0, %s357
      %s360 = sphi 0, %s359
      %s374 = sphi 0, %s360
      %s378 = sphi 0, %s378
      %s380 = sphi 0, %s378
      %s381 = sphi 0, %s380
      %s395 = sphi 0, %s381
      %s399 = sphi 0, %s399
      %s401 = sphi 0, %s399
      %s402 = sphi 0, %s401
      %s416 = sphi 0, %s402
      %s420 = sphi 0, %s420
      %s422 = sphi 0, %s420
      %s423 = sphi 0, %s422
      %s437 = sphi 0, %s423
      %s441 = sphi 0, %s441
      %s443 = sphi 0, %s441
      %s444 = sphi 0, %s443
      %s458 = sphi 0, %s444
      %s462 = sphi 0, %s462
      %s464 = sphi 0, %s462
      %s465 = sphi 0, %s464
      %s479 = sphi 0, %s465
      %s483 = sphi 0, %s483
      %s485 = sphi 0, %s483
      %s486 = sphi 0, %s485
      %s500 = sphi 0, %s486
      %s508 = sphi 0, %s510
      %s511 = sphi 0, %s508
      %s512 = sphi 0, %s511
      %s528 = sphi 0, %s512
    $region4: #{_mfuser_call.1} parent=1 // loop_header_branch
      %32 = sbr.rel (%p30) target = $region8
    $region5: #{_mfuser_call.1} parent=1 // loop_body
      %s34 = ssub.s32 %s29, 1
      %s35 = ssub.s32 %s29, 2
      %s45 = sadd.s32 1, %s38
      %p46 = scmp.ge.s32.totalorder %s45, 2
      %s47 = scalar_select %p46, 0, %s45
      %s48 = sadd.s32 1, %s37
      %s49 = scalar_select %p46, %s48, %s37
      %p50 = scmp.ge.s32.totalorder %s49, 2
      %s51 = scalar_select %p50, 0, %s49
      %s52 = sadd.s32 1, %s36
      %s53 = scalar_select %p50, %s52, %s36
      %p54 = scmp.ge.s32.totalorder %s53, 2
      %s55 = scalar_select %p54, 0, %s53
      %s56 = ssub.s32 %s36, %s55
      %s57 = ssub.s32 %s37, %s51
      %s58 = sor.u32 %s56, %s57
      %p59 = scmp.eq.s32.totalorder %s58, 0
      %s61 = sadd.s32 %s60, 1
      %s62 = scalar_select %p59, %s60, %s61
      %p65 = pneg %p59
      %p66 = scmp.eq.s32.totalorder %s29, 7
      %p67 = por %p65, %p66
      %p68 = scmp.ne.s32.totalorder %s60, %s63
      %p69 = scmp.eq.s32.totalorder %s29, 0
      %p70 = por %p68, %p69
      %p71 = scmp.ne.s32.totalorder %s60, %s63
      %p72 = scmp.eq.s32.totalorder %s34, 7
      %p73 = por %p71, %p72
      %p74 = scmp.ne.s32.totalorder %s63, %s64
      %p75 = scmp.eq.s32.totalorder %s34, 0
      %p76 = por %p74, %p75
      %p77 = scmp.ne.s32.totalorder %s63, %s64
      %p78 = scmp.eq.s32.totalorder %s35, 7
      %p79 = por %p77, %p78
      %p81 = scmp.ne.s32.totalorder %s64, %s80
      %p82 = scmp.eq.s32.totalorder %s35, 0
      %p83 = por %p81, %p82
      %s84 = ssub.s32 %s36, %s55
      %s85 = ssub.s32 %s37, %s51
      %s86 = sor.u32 %s84, %s85
      %p87 = scmp.eq.s32.totalorder %s86, 0
      %s89 = sadd.s32 %s88, 1
      %s90 = scalar_select %p87, %s88, %s89
      %p93 = pneg %p87
      %p94 = scmp.eq.s32.totalorder %s29, 7
      %p95 = por %p93, %p94
      %p96 = scmp.ne.s32.totalorder %s88, %s91
      %p97 = scmp.eq.s32.totalorder %s29, 0
      %p98 = por %p96, %p97
      %p99 = scmp.ne.s32.totalorder %s88, %s91
      %p100 = scmp.eq.s32.totalorder %s34, 7
      %p101 = por %p99, %p100
      %p102 = scmp.ne.s32.totalorder %s91, %s92
      %p103 = scmp.eq.s32.totalorder %s34, 0
      %p104 = por %p102, %p103
      %p105 = scmp.ne.s32.totalorder %s91, %s92
      %p106 = scmp.eq.s32.totalorder %s35, 7
      %p107 = por %p105, %p106
      %p109 = scmp.ne.s32.totalorder %s92, %s108
      %p110 = scmp.eq.s32.totalorder %s35, 0
      %p111 = por %p109, %p110
      %s112 = ssub.s32 %s36, %s55
      %s113 = ssub.s32 %s38, %s47
      %s114 = sor.u32 %s112, %s113
      %p115 = scmp.eq.s32.totalorder %s114, 0
      %s117 = sadd.s32 %s116, 1
      %s118 = scalar_select %p115, %s116, %s117
      %p121 = pneg %p115
      %p122 = scmp.eq.s32.totalorder %s29, 7
      %p123 = por %p121, %p122
      %p124 = scmp.ne.s32.totalorder %s116, %s119
      %p125 = scmp.eq.s32.totalorder %s29, 0
      %p126 = por %p124, %p125
      %p127 = scmp.ne.s32.totalorder %s116, %s119
      %p128 = scmp.eq.s32.totalorder %s34, 7
      %p129 = por %p127, %p128
      %p130 = scmp.ne.s32.totalorder %s119, %s120
      %p131 = scmp.eq.s32.totalorder %s34, 0
      %p132 = por %p130, %p131
      %p133 = scmp.ne.s32.totalorder %s119, %s120
      %p134 = scmp.eq.s32.totalorder %s35, 7
      %p135 = por %p133, %p134
      %p137 = scmp.ne.s32.totalorder %s120, %s136
      %p138 = scmp.eq.s32.totalorder %s35, 0
      %p139 = por %p137, %p138
      %s140 = ssub.s32 %s36, %s55
      %s141 = ssub.s32 %s38, %s47
      %s142 = sor.u32 %s140, %s141
      %p143 = scmp.eq.s32.totalorder %s142, 0
      %s145 = sadd.s32 %s144, 1
      %s146 = scalar_select %p143, %s144, %s145
      %p149 = pneg %p143
      %p150 = scmp.eq.s32.totalorder %s29, 7
      %p151 = por %p149, %p150
      %p152 = scmp.ne.s32.totalorder %s144, %s147
      %p153 = scmp.eq.s32.totalorder %s29, 0
      %p154 = por %p152, %p153
      %p155 = scmp.ne.s32.totalorder %s144, %s147
      %p156 = scmp.eq.s32.totalorder %s34, 7
      %p157 = por %p155, %p156
      %p158 = scmp.ne.s32.totalorder %s147, %s148
      %p159 = scmp.eq.s32.totalorder %s34, 0
      %p160 = por %p158, %p159
      %p161 = scmp.ne.s32.totalorder %s147, %s148
      %p162 = scmp.eq.s32.totalorder %s35, 7
      %p163 = por %p161, %p162
      %p165 = scmp.ne.s32.totalorder %s148, %s164
      %p166 = scmp.eq.s32.totalorder %s35, 0
      %p167 = por %p165, %p166
      %s169 = sadd.s32 %s168, 1
      %p172 = scmp.eq.s32.totalorder %s29, 7
      %p173 = scmp.ne.s32.totalorder %s168, %s170
      %p174 = scmp.eq.s32.totalorder %s29, 0
      %p175 = por %p173, %p174
      %p176 = scmp.ne.s32.totalorder %s168, %s170
      %p177 = scmp.eq.s32.totalorder %s34, 7
      %p178 = por %p176, %p177
      %p179 = scmp.ne.s32.totalorder %s170, %s171
      %p180 = scmp.eq.s32.totalorder %s34, 0
      %p181 = por %p179, %p180
      %p182 = scmp.ne.s32.totalorder %s170, %s171
      %p183 = scmp.eq.s32.totalorder %s35, 7
      %p184 = por %p182, %p183
      %p186 = scmp.ne.s32.totalorder %s171, %s185
      %p187 = scmp.eq.s32.totalorder %s35, 0
      %p188 = por %p186, %p187
      %s190 = sadd.s32 %s189, 1
      %p193 = scmp.eq.s32.totalorder %s29, 7
      %p194 = scmp.ne.s32.totalorder %s189, %s191
      %p195 = scmp.eq.s32.totalorder %s29, 0
      %p196 = por %p194, %p195
      %p197 = scmp.ne.s32.totalorder %s189, %s191
      %p198 = scmp.eq.s32.totalorder %s34, 7
      %p199 = por %p197, %p198
      %p200 = scmp.ne.s32.totalorder %s191, %s192
      %p201 = scmp.eq.s32.totalorder %s34, 0
      %p202 = por %p200, %p201
      %p203 = scmp.ne.s32.totalorder %s191, %s192
      %p204 = scmp.eq.s32.totalorder %s35, 7
      %p205 = por %p203, %p204
      %p207 = scmp.ne.s32.totalorder %s192, %s206
      %p208 = scmp.eq.s32.totalorder %s35, 0
      %p209 = por %p207, %p208
      %s211 = sadd.s32 %s210, 1
      %p214 = scmp.eq.s32.totalorder %s29, 7
      %p215 = scmp.ne.s32.totalorder %s210, %s212
      %p216 = scmp.eq.s32.totalorder %s29, 0
      %p217 = por %p215, %p216
      %p218 = scmp.ne.s32.totalorder %s210, %s212
      %p219 = scmp.eq.s32.totalorder %s34, 7
      %p220 = por %p218, %p219
      %p221 = scmp.ne.s32.totalorder %s212, %s213
      %p222 = scmp.eq.s32.totalorder %s34, 0
      %p223 = por %p221, %p222
      %p224 = scmp.ne.s32.totalorder %s212, %s213
      %p225 = scmp.eq.s32.totalorder %s35, 7
      %p226 = por %p224, %p225
      %p228 = scmp.ne.s32.totalorder %s213, %s227
      %p229 = scmp.eq.s32.totalorder %s35, 0
      %p230 = por %p228, %p229
      %s232 = sadd.s32 %s231, 1
      %p235 = scmp.eq.s32.totalorder %s29, 7
      %p236 = scmp.ne.s32.totalorder %s231, %s233
      %p237 = scmp.eq.s32.totalorder %s29, 0
      %p238 = por %p236, %p237
      %p239 = scmp.ne.s32.totalorder %s231, %s233
      %p240 = scmp.eq.s32.totalorder %s34, 7
      %p241 = por %p239, %p240
      %p242 = scmp.ne.s32.totalorder %s233, %s234
      %p243 = scmp.eq.s32.totalorder %s34, 0
      %p244 = por %p242, %p243
      %p245 = scmp.ne.s32.totalorder %s233, %s234
      %p246 = scmp.eq.s32.totalorder %s35, 7
      %p247 = por %p245, %p246
      %p249 = scmp.ne.s32.totalorder %s234, %s248
      %p250 = scmp.eq.s32.totalorder %s35, 0
      %p251 = por %p249, %p250
      %s253 = sadd.s32 %s252, 1
      %p256 = scmp.eq.s32.totalorder %s29, 7
      %p257 = scmp.ne.s32.totalorder %s252, %s254
      %p258 = scmp.eq.s32.totalorder %s29, 0
      %p259 = por %p257, %p258
      %p260 = scmp.ne.s32.totalorder %s252, %s254
      %p261 = scmp.eq.s32.totalorder %s34, 7
      %p262 = por %p260, %p261
      %p263 = scmp.ne.s32.totalorder %s254, %s255
      %p264 = scmp.eq.s32.totalorder %s34, 0
      %p265 = por %p263, %p264
      %p266 = scmp.ne.s32.totalorder %s254, %s255
      %p267 = scmp.eq.s32.totalorder %s35, 7
      %p268 = por %p266, %p267
      %p270 = scmp.ne.s32.totalorder %s255, %s269
      %p271 = scmp.eq.s32.totalorder %s35, 0
      %p272 = por %p270, %p271
      %s274 = sadd.s32 %s273, 1
      %p277 = scmp.eq.s32.totalorder %s29, 7
      %p278 = scmp.ne.s32.totalorder %s273, %s275
      %p279 = scmp.eq.s32.totalorder %s29, 0
      %p280 = por %p278, %p279
      %p281 = scmp.ne.s32.totalorder %s273, %s275
      %p282 = scmp.eq.s32.totalorder %s34, 7
      %p283 = por %p281, %p282
      %p284 = scmp.ne.s32.totalorder %s275, %s276
      %p285 = scmp.eq.s32.totalorder %s34, 0
      %p286 = por %p284, %p285
      %p287 = scmp.ne.s32.totalorder %s275, %s276
      %p288 = scmp.eq.s32.totalorder %s35, 7
      %p289 = por %p287, %p288
      %p291 = scmp.ne.s32.totalorder %s276, %s290
      %p292 = scmp.eq.s32.totalorder %s35, 0
      %p293 = por %p291, %p292
      %s295 = sadd.s32 %s294, 1
      %p298 = scmp.eq.s32.totalorder %s29, 7
      %p299 = scmp.ne.s32.totalorder %s294, %s296
      %p300 = scmp.eq.s32.totalorder %s29, 0
      %p301 = por %p299, %p300
      %p302 = scmp.ne.s32.totalorder %s294, %s296
      %p303 = scmp.eq.s32.totalorder %s34, 7
      %p304 = por %p302, %p303
      %p305 = scmp.ne.s32.totalorder %s296, %s297
      %p306 = scmp.eq.s32.totalorder %s34, 0
      %p307 = por %p305, %p306
      %p308 = scmp.ne.s32.totalorder %s296, %s297
      %p309 = scmp.eq.s32.totalorder %s35, 7
      %p310 = por %p308, %p309
      %p312 = scmp.ne.s32.totalorder %s297, %s311
      %p313 = scmp.eq.s32.totalorder %s35, 0
      %p314 = por %p312, %p313
      %s316 = sadd.s32 %s315, 1
      %p319 = scmp.eq.s32.totalorder %s29, 7
      %p320 = scmp.ne.s32.totalorder %s315, %s317
      %p321 = scmp.eq.s32.totalorder %s29, 0
      %p322 = por %p320, %p321
      %p323 = scmp.ne.s32.totalorder %s315, %s317
      %p324 = scmp.eq.s32.totalorder %s34, 7
      %p325 = por %p323, %p324
      %p326 = scmp.ne.s32.totalorder %s317, %s318
      %p327 = scmp.eq.s32.totalorder %s34, 0
      %p328 = por %p326, %p327
      %p329 = scmp.ne.s32.totalorder %s317, %s318
      %p330 = scmp.eq.s32.totalorder %s35, 7
      %p331 = por %p329, %p330
      %p333 = scmp.ne.s32.totalorder %s318, %s332
      %p334 = scmp.eq.s32.totalorder %s35, 0
      %p335 = por %p333, %p334
      %s337 = sadd.s32 %s336, 1
      %p340 = scmp.eq.s32.totalorder %s29, 7
      %p341 = scmp.ne.s32.totalorder %s336, %s338
      %p342 = scmp.eq.s32.totalorder %s29, 0
      %p343 = por %p341, %p342
      %p344 = scmp.ne.s32.totalorder %s336, %s338
      %p345 = scmp.eq.s32.totalorder %s34, 7
      %p346 = por %p344, %p345
      %p347 = scmp.ne.s32.totalorder %s338, %s339
      %p348 = scmp.eq.s32.totalorder %s34, 0
      %p349 = por %p347, %p348
      %p350 = scmp.ne.s32.totalorder %s338, %s339
      %p351 = scmp.eq.s32.totalorder %s35, 7
      %p352 = por %p350, %p351
      %p354 = scmp.ne.s32.totalorder %s339, %s353
      %p355 = scmp.eq.s32.totalorder %s35, 0
      %p356 = por %p354, %p355
      %s358 = sadd.s32 %s357, 1
      %p361 = scmp.eq.s32.totalorder %s29, 7
      %p362 = scmp.ne.s32.totalorder %s357, %s359
      %p363 = scmp.eq.s32.totalorder %s29, 0
      %p364 = por %p362, %p363
      %p365 = scmp.ne.s32.totalorder %s357, %s359
      %p366 = scmp.eq.s32.totalorder %s34, 7
      %p367 = por %p365, %p366
      %p368 = scmp.ne.s32.totalorder %s359, %s360
      %p369 = scmp.eq.s32.totalorder %s34, 0
      %p370 = por %p368, %p369
      %p371 = scmp.ne.s32.totalorder %s359, %s360
      %p372 = scmp.eq.s32.totalorder %s35, 7
      %p373 = por %p371, %p372
      %p375 = scmp.ne.s32.totalorder %s360, %s374
      %p376 = scmp.eq.s32.totalorder %s35, 0
      %p377 = por %p375, %p376
      %s379 = sadd.s32 %s378, 1
      %p382 = scmp.eq.s32.totalorder %s29, 7
      %p383 = scmp.ne.s32.totalorder %s378, %s380
      %p384 = scmp.eq.s32.totalorder %s29, 0
      %p385 = por %p383, %p384
      %p386 = scmp.ne.s32.totalorder %s378, %s380
      %p387 = scmp.eq.s32.totalorder %s34, 7
      %p388 = por %p386, %p387
      %p389 = scmp.ne.s32.totalorder %s380, %s381
      %p390 = scmp.eq.s32.totalorder %s34, 0
      %p391 = por %p389, %p390
      %p392 = scmp.ne.s32.totalorder %s380, %s381
      %p393 = scmp.eq.s32.totalorder %s35, 7
      %p394 = por %p392, %p393
      %p396 = scmp.ne.s32.totalorder %s381, %s395
      %p397 = scmp.eq.s32.totalorder %s35, 0
      %p398 = por %p396, %p397
      %s400 = sadd.s32 %s399, 1
      %p403 = scmp.eq.s32.totalorder %s29, 7
      %p404 = scmp.ne.s32.totalorder %s399, %s401
      %p405 = scmp.eq.s32.totalorder %s29, 0
      %p406 = por %p404, %p405
      %p407 = scmp.ne.s32.totalorder %s399, %s401
      %p408 = scmp.eq.s32.totalorder %s34, 7
      %p409 = por %p407, %p408
      %p410 = scmp.ne.s32.totalorder %s401, %s402
      %p411 = scmp.eq.s32.totalorder %s34, 0
      %p412 = por %p410, %p411
      %p413 = scmp.ne.s32.totalorder %s401, %s402
      %p414 = scmp.eq.s32.totalorder %s35, 7
      %p415 = por %p413, %p414
      %p417 = scmp.ne.s32.totalorder %s402, %s416
      %p418 = scmp.eq.s32.totalorder %s35, 0
      %p419 = por %p417, %p418
      %s421 = sadd.s32 %s420, 1
      %p424 = scmp.eq.s32.totalorder %s29, 7
      %p425 = scmp.ne.s32.totalorder %s420, %s422
      %p426 = scmp.eq.s32.totalorder %s29, 0
      %p427 = por %p425, %p426
      %p428 = scmp.ne.s32.totalorder %s420, %s422
      %p429 = scmp.eq.s32.totalorder %s34, 7
      %p430 = por %p428, %p429
      %p431 = scmp.ne.s32.totalorder %s422, %s423
      %p432 = scmp.eq.s32.totalorder %s34, 0
      %p433 = por %p431, %p432
      %p434 = scmp.ne.s32.totalorder %s422, %s423
      %p435 = scmp.eq.s32.totalorder %s35, 7
      %p436 = por %p434, %p435
      %p438 = scmp.ne.s32.totalorder %s423, %s437
      %p439 = scmp.eq.s32.totalorder %s35, 0
      %p440 = por %p438, %p439
      %s442 = sadd.s32 %s441, 1
      %p445 = scmp.eq.s32.totalorder %s29, 7
      %p446 = scmp.ne.s32.totalorder %s441, %s443
      %p447 = scmp.eq.s32.totalorder %s29, 0
      %p448 = por %p446, %p447
      %p449 = scmp.ne.s32.totalorder %s441, %s443
      %p450 = scmp.eq.s32.totalorder %s34, 7
      %p451 = por %p449, %p450
      %p452 = scmp.ne.s32.totalorder %s443, %s444
      %p453 = scmp.eq.s32.totalorder %s34, 0
      %p454 = por %p452, %p453
      %p455 = scmp.ne.s32.totalorder %s443, %s444
      %p456 = scmp.eq.s32.totalorder %s35, 7
      %p457 = por %p455, %p456
      %p459 = scmp.ne.s32.totalorder %s444, %s458
      %p460 = scmp.eq.s32.totalorder %s35, 0
      %p461 = por %p459, %p460
      %s463 = sadd.s32 %s462, 1
      %p466 = scmp.eq.s32.totalorder %s29, 7
      %p467 = scmp.ne.s32.totalorder %s462, %s464
      %p468 = scmp.eq.s32.totalorder %s29, 0
      %p469 = por %p467, %p468
      %p470 = scmp.ne.s32.totalorder %s462, %s464
      %p471 = scmp.eq.s32.totalorder %s34, 7
      %p472 = por %p470, %p471
      %p473 = scmp.ne.s32.totalorder %s464, %s465
      %p474 = scmp.eq.s32.totalorder %s34, 0
      %p475 = por %p473, %p474
      %p476 = scmp.ne.s32.totalorder %s464, %s465
      %p477 = scmp.eq.s32.totalorder %s35, 7
      %p478 = por %p476, %p477
      %p480 = scmp.ne.s32.totalorder %s465, %s479
      %p481 = scmp.eq.s32.totalorder %s35, 0
      %p482 = por %p480, %p481
      %s484 = sadd.s32 %s483, 1
      %p487 = scmp.eq.s32.totalorder %s29, 7
      %p488 = scmp.ne.s32.totalorder %s483, %s485
      %p489 = scmp.eq.s32.totalorder %s29, 0
      %p490 = por %p488, %p489
      %p491 = scmp.ne.s32.totalorder %s483, %s485
      %p492 = scmp.eq.s32.totalorder %s34, 7
      %p493 = por %p491, %p492
      %p494 = scmp.ne.s32.totalorder %s485, %s486
      %p495 = scmp.eq.s32.totalorder %s34, 0
      %p496 = por %p494, %p495
      %p497 = scmp.ne.s32.totalorder %s485, %s486
      %p498 = scmp.eq.s32.totalorder %s35, 7
      %p499 = por %p497, %p498
      %p501 = scmp.ne.s32.totalorder %s486, %s500
      %p502 = scmp.eq.s32.totalorder %s35, 0
      %p503 = por %p501, %p502
      %s504 = ssub.s32 %s36, %s55
      %s505 = ssub.s32 %s37, %s51
      %s506 = sor.u32 %s504, %s505
      %p507 = scmp.eq.s32.totalorder %s506, 0
      %s509 = sadd.s32 %s508, 1
      %s510 = scalar_select %p507, %s508, %s509
      %p513 = pneg %p507
      %p514 = scmp.eq.s32.totalorder %s29, 7
      %p515 = por %p513, %p514
      %p516 = scmp.ne.s32.totalorder %s508, %s511
      %p517 = scmp.eq.s32.totalorder %s29, 0
      %p518 = por %p516, %p517
      %p519 = scmp.ne.s32.totalorder %s508, %s511
      %p520 = scmp.eq.s32.totalorder %s34, 7
      %p521 = por %p519, %p520
      %p522 = scmp.ne.s32.totalorder %s511, %s512
      %p523 = scmp.eq.s32.totalorder %s34, 0
      %p524 = por %p522, %p523
      %p525 = scmp.ne.s32.totalorder %s511, %s512
      %p526 = scmp.eq.s32.totalorder %s35, 7
      %p527 = por %p525, %p526
      %p529 = scmp.ne.s32.totalorder %s512, %s528
      %p530 = scmp.eq.s32.totalorder %s35, 0
      %p531 = por %p529, %p530
      %p532 = scmp.le.s32.totalorder 1, %s29
      %p533 = scmp.lt.s32.totalorder %s29, 9
      %p534 = pnand %p532, %p533
      %p535 = pneg %p534
      // Predicated region
      $region9: #{_mfuser_call.1} parent=5 // pred_check
        _
      $region10: #{_mfuser_call.1} parent=5 // pred_check_branch
        %537 = sbr.rel (%p534) target = $region12
      $region11: #{_mfuser_call.1} parent=5 // pred_region
        %s538 = ssub.s32 %s29, 1
        // Predicated region
        $region13: #{_mfuser_call.1} parent=11 // pred_check
          %p539 = pneg %p181
        $region14: #{_mfuser_call.1} parent=11 // pred_check_branch
          %541 = sbr.rel (%p539) target = $region16
        $region15: #{_mfuser_call.1} parent=11 // pred_region
          _
        $region16: #{_mfuser_call.1} parent=11 // pred_fallthru
          _
        // Predicated region
        $region17: #{_mfuser_call.1} parent=11 // pred_check
          %p542 = pneg %p202
        $region18: #{_mfuser_call.1} parent=11 // pred_check_branch
          %544 = sbr.rel (%p542) target = $region20
        $region19: #{_mfuser_call.1} parent=11 // pred_region
          _
        $region20: #{_mfuser_call.1} parent=11 // pred_fallthru
          _
        // Predicated region
        $region21: #{_mfuser_call.1} parent=11 // pred_check
          %p545 = pneg %p223
        $region22: #{_mfuser_call.1} parent=11 // pred_check_branch
          %547 = sbr.rel (%p545) target = $region24
        $region23: #{_mfuser_call.1} parent=11 // pred_region
          _
        $region24: #{_mfuser_call.1} parent=11 // pred_fallthru
          _
        // Predicated region
        $region25: #{_mfuser_call.1} parent=11 // pred_check
          %p548 = pneg %p244
        $region26: #{_mfuser_call.1} parent=11 // pred_check_branch
          %550 = sbr.rel (%p548) target = $region28
        $region27: #{_mfuser_call.1} parent=11 // pred_region
          %s552 = ssub.s32 16, 16
          %553 = vsyncadd [#allocation8], %s552
          %s555 = sshll.u32 [#allocation7], 4
          %s556 = int_to_ptr.vmem [resolvable:$true] %s555
          %558 = dma.hbm_to_vmem [thread:$0]  %s7, 16, %s556, [#allocation8]
        $region28: #{_mfuser_call.1} parent=11 // pred_fallthru
          _
        // Predicated region
        $region29: #{_mfuser_call.1} parent=11 // pred_check
          %p559 = pneg %p265
        $region30: #{_mfuser_call.1} parent=11 // pred_check_branch
          %561 = sbr.rel (%p559) target = $region32
        $region31: #{_mfuser_call.1} parent=11 // pred_region
          _
        $region32: #{_mfuser_call.1} parent=11 // pred_fallthru
          _
        // Predicated region
        $region33: #{_mfuser_call.1} parent=11 // pred_check
          %p562 = pneg %p286
        $region34: #{_mfuser_call.1} parent=11 // pred_check_branch
          %564 = sbr.rel (%p562) target = $region36
        $region35: #{_mfuser_call.1} parent=11 // pred_region
          _
        $region36: #{_mfuser_call.1} parent=11 // pred_fallthru
          _
        // Predicated region
        $region37: #{_mfuser_call.1} parent=11 // pred_check
          %p565 = pneg %p307
        $region38: #{_mfuser_call.1} parent=11 // pred_check_branch
          %567 = sbr.rel (%p565) target = $region40
        $region39: #{_mfuser_call.1} parent=11 // pred_region
          %s569 = ssub.s32 1024, 1024
          %570 = vsyncadd [#allocation10], %s569
          %s571 = sshll.u32 [#allocation9], 4
          %s572 = int_to_ptr.vmem [resolvable:$true] %s571
          %577 = dma.hbm_to_vmem [thread:$0]  %s10, 1024, %s572, [#allocation10], 64, 64, 4
        $region40: #{_mfuser_call.1} parent=11 // pred_fallthru
          _
        // Predicated region
        $region41: #{_mfuser_call.1} parent=11 // pred_check
          %p578 = pneg %p328
        $region42: #{_mfuser_call.1} parent=11 // pred_check_branch
          %580 = sbr.rel (%p578) target = $region44
        $region43: #{_mfuser_call.1} parent=11 // pred_region
          _
        $region44: #{_mfuser_call.1} parent=11 // pred_fallthru
          _
        // Predicated region
        $region45: #{_mfuser_call.1} parent=11 // pred_check
          %p581 = pneg %p349
        $region46: #{_mfuser_call.1} parent=11 // pred_check_branch
          %583 = sbr.rel (%p581) target = $region48
        $region47: #{_mfuser_call.1} parent=11 // pred_region
          _
        $region48: #{_mfuser_call.1} parent=11 // pred_fallthru
          _
        // Predicated region
        $region49: #{_mfuser_call.1} parent=11 // pred_check
          %p584 = pneg %p370
        $region50: #{_mfuser_call.1} parent=11 // pred_check_branch
          %586 = sbr.rel (%p584) target = $region52
        $region51: #{_mfuser_call.1} parent=11 // pred_region
          _
        $region52: #{_mfuser_call.1} parent=11 // pred_fallthru
          _
        // Predicated region
        $region53: #{_mfuser_call.1} parent=11 // pred_check
          %p587 = pneg %p391
        $region54: #{_mfuser_call.1} parent=11 // pred_check_branch
          %589 = sbr.rel (%p587) target = $region56
        $region55: #{_mfuser_call.1} parent=11 // pred_region
          %s591 = ssub.s32 1024, 1024
          %592 = vsyncadd [#allocation10], %s591
          %s593 = sshll.u32 [#allocation11], 4
          %s594 = int_to_ptr.vmem [resolvable:$true] %s593
          %599 = dma.hbm_to_vmem [thread:$0]  %s14, 1024, %s594, [#allocation10], 64, 64, 4
        $region56: #{_mfuser_call.1} parent=11 // pred_fallthru
          _
        // Predicated region
        $region57: #{_mfuser_call.1} parent=11 // pred_check
          %p600 = pneg %p412
        $region58: #{_mfuser_call.1} parent=11 // pred_check_branch
          %602 = sbr.rel (%p600) target = $region60
        $region59: #{_mfuser_call.1} parent=11 // pred_region
          _
        $region60: #{_mfuser_call.1} parent=11 // pred_fallthru
          _
        // Predicated region
        $region61: #{_mfuser_call.1} parent=11 // pred_check
          %p603 = pneg %p433
        $region62: #{_mfuser_call.1} parent=11 // pred_check_branch
          %605 = sbr.rel (%p603) target = $region64
        $region63: #{_mfuser_call.1} parent=11 // pred_region
          _
        $region64: #{_mfuser_call.1} parent=11 // pred_fallthru
          _
        // Predicated region
        $region65: #{_mfuser_call.1} parent=11 // pred_check
          %p606 = pneg %p454
        $region66: #{_mfuser_call.1} parent=11 // pred_check_branch
          %608 = sbr.rel (%p606) target = $region68
        $region67: #{_mfuser_call.1} parent=11 // pred_region
          _
        $region68: #{_mfuser_call.1} parent=11 // pred_fallthru
          _
        // Predicated region
        $region69: #{_mfuser_call.1} parent=11 // pred_check
          %p609 = pneg %p475
        $region70: #{_mfuser_call.1} parent=11 // pred_check_branch
          %611 = sbr.rel (%p609) target = $region72
        $region71: #{_mfuser_call.1} parent=11 // pred_region
          %s613 = ssub.s32 2048, 2048
          %614 = vsyncadd [#allocation13], %s613
          %s615 = sshll.u32 [#allocation12], 4
          %s616 = int_to_ptr.vmem [resolvable:$true] %s615
          %621 = dma.hbm_to_vmem [thread:$0]  %s18, 2048, %s616, [#allocation13], 64, 64, 4
        $region72: #{_mfuser_call.1} parent=11 // pred_fallthru
          _
        // Predicated region
        $region73: #{_mfuser_call.1} parent=11 // pred_check
          %p622 = pneg %p496
        $region74: #{_mfuser_call.1} parent=11 // pred_check_branch
          %624 = sbr.rel (%p622) target = $region76
        $region75: #{_mfuser_call.1} parent=11 // pred_region
          _
        $region76: #{_mfuser_call.1} parent=11 // pred_fallthru
          _
      $region12: #{_mfuser_call.1} parent=5 // pred_fallthru
        _
      %p625 = scmp.lt.s32.totalorder %s29, 8
      // Predicated region
      $region77: #{_mfuser_call.1} parent=5 // pred_check
        %p626 = pneg %p625
      $region78: #{_mfuser_call.1} parent=5 // pred_check_branch
        %628 = sbr.rel (%p626) target = $region80
      $region79: #{_mfuser_call.1} parent=5 // pred_region
        // Predicated region
        $region81: #{_mfuser_call.1} parent=79 // pred_check
          %p629 = pneg %p70
        $region82: #{_mfuser_call.1} parent=79 // pred_check_branch
          %631 = sbr.rel (%p629) target = $region84
        $region83: #{_mfuser_call.1} parent=79 // pred_region
          %s632 = smul.u32 2, %s37
          %p633 = scmp.lt.s32.totalorder %s36, 1
          %s634 = scalar_select %p633, %s36, 1
          %p635 = scmp.lt.s32.totalorder %s632, 3
          %s636 = scalar_select %p635, %s632, 3
          %s637 = smul.addr %s634, 4
          %s638 = sadd.s32 %s636, %s637
          %s639 = smul.addr %s638, 8
          %s640 = scalar_lea.vmem %s0, %s639
          %s641 = smul.u32 2, %s37
        $region84: #{_mfuser_call.1} parent=79 // pred_fallthru
          _
        // Predicated region
        $region85: #{_mfuser_call.1} parent=79 // pred_check
          %p642 = pneg %p98
        $region86: #{_mfuser_call.1} parent=79 // pred_check_branch
          %644 = sbr.rel (%p642) target = $region88
        $region87: #{_mfuser_call.1} parent=79 // pred_region
          %s645 = smul.u32 2, %s37
          %p646 = scmp.lt.s32.totalorder %s36, 1
          %s647 = scalar_select %p646, %s36, 1
          %p648 = scmp.lt.s32.totalorder %s645, 3
          %s649 = scalar_select %p648, %s645, 3
          %s650 = smul.addr %s647, 4
          %s651 = sadd.s32 %s649, %s650
          %s652 = smul.addr %s651, 8
          %s653 = scalar_lea.vmem %s1, %s652
          %s654 = smul.u32 2, %s37
        $region88: #{_mfuser_call.1} parent=79 // pred_fallthru
          _
        // Predicated region
        $region89: #{_mfuser_call.1} parent=79 // pred_check
          %p655 = pneg %p126
        $region90: #{_mfuser_call.1} parent=79 // pred_check_branch
          %657 = sbr.rel (%p655) target = $region92
        $region91: #{_mfuser_call.1} parent=79 // pred_region
          %s658 = smul.u32 2, %s38
          %p659 = scmp.lt.s32.totalorder %s36, 1
          %s660 = scalar_select %p659, %s36, 1
          %p661 = scmp.lt.s32.totalorder %s658, 3
          %s662 = scalar_select %p661, %s658, 3
          %s663 = smul.addr %s660, 4
          %s664 = sadd.s32 %s662, %s663
          %s665 = smul.addr %s664, 8
          %s666 = scalar_lea.vmem %s2, %s665
          %s667 = smul.u32 2, %s38
        $region92: #{_mfuser_call.1} parent=79 // pred_fallthru
          _
        // Predicated region
        $region93: #{_mfuser_call.1} parent=79 // pred_check
          %p668 = pneg %p154
        $region94: #{_mfuser_call.1} parent=79 // pred_check_branch
          %670 = sbr.rel (%p668) target = $region96
        $region95: #{_mfuser_call.1} parent=79 // pred_region
          %s671 = smul.u32 2, %s38
          %p672 = scmp.lt.s32.totalorder %s36, 1
          %s673 = scalar_select %p672, %s36, 1
          %p674 = scmp.lt.s32.totalorder %s671, 3
          %s675 = scalar_select %p674, %s671, 3
          %s676 = smul.addr %s673, 4
          %s677 = sadd.s32 %s675, %s676
          %s678 = smul.addr %s677, 8
          %s679 = scalar_lea.vmem %s3, %s678
          %s680 = smul.u32 2, %s38
        $region96: #{_mfuser_call.1} parent=79 // pred_fallthru
          _
      $region80: #{_mfuser_call.1} parent=5 // pred_fallthru
        _
      %p681 = scmp.le.s32.totalorder 1, %s29
      %p682 = scmp.lt.s32.totalorder %s29, 9
      %p683 = pnand %p681, %p682
      %p684 = pneg %p683
      // Predicated region
      $region97: #{_mfuser_call.1} parent=5 // pred_check
        _
      $region98: #{_mfuser_call.1} parent=5 // pred_check_branch
        %686 = sbr.rel (%p683) target = $region100
      $region99: #{_mfuser_call.1} parent=5 // pred_region
        %s687 = ssub.s32 %s29, 1
        // Predicated region
        $region101: #{_mfuser_call.1} parent=99 // pred_check
          %p688 = pneg %p244
        $region102: #{_mfuser_call.1} parent=99 // pred_check_branch
          %690 = sbr.rel (%p688) target = $region104
        $region103: #{_mfuser_call.1} parent=99 // pred_region
          %691 = dma.done [#allocation8], 16
        $region104: #{_mfuser_call.1} parent=99 // pred_fallthru
          _
        // Predicated region
        $region105: #{_mfuser_call.1} parent=99 // pred_check
          %p692 = pneg %p307
        $region106: #{_mfuser_call.1} parent=99 // pred_check_branch
          %694 = sbr.rel (%p692) target = $region108
        $region107: #{_mfuser_call.1} parent=99 // pred_region
          %695 = dma.done [#allocation10], 1024
        $region108: #{_mfuser_call.1} parent=99 // pred_fallthru
          _
        // Predicated region
        $region109: #{_mfuser_call.1} parent=99 // pred_check
          %p696 = pneg %p391
        $region110: #{_mfuser_call.1} parent=99 // pred_check_branch
          %698 = sbr.rel (%p696) target = $region112
        $region111: #{_mfuser_call.1} parent=99 // pred_region
          %699 = dma.done [#allocation10], 1024
        $region112: #{_mfuser_call.1} parent=99 // pred_fallthru
          _
        // Predicated region
        $region113: #{_mfuser_call.1} parent=99 // pred_check
          %p700 = pneg %p475
        $region114: #{_mfuser_call.1} parent=99 // pred_check_branch
          %702 = sbr.rel (%p700) target = $region116
        $region115: #{_mfuser_call.1} parent=99 // pred_region
          %703 = dma.done [#allocation13], 2048
        $region116: #{_mfuser_call.1} parent=99 // pred_fallthru
          _
        %s704 = smul.u32 2, %s40
        %p705 = scmp.lt.s32.totalorder %s39, 1
        %s706 = scalar_select %p705, %s39, 1
        %p707 = scmp.lt.s32.totalorder %s704, 3
        %s708 = scalar_select %p707, %s704, 3
        %s709 = smul.addr %s706, 4
        %s710 = sadd.s32 %s708, %s709
        %s711 = smul.addr %s710, 8
        %s712 = scalar_lea.vmem %s0, %s711
        %p713 = pneg %p76
        %p714 = pneg %p73
        %s715 = smul.u32 2, %s40
        %p716 = scmp.lt.s32.totalorder %s39, 1
        %s717 = scalar_select %p716, %s39, 1
        %p718 = scmp.lt.s32.totalorder %s715, 3
        %s719 = scalar_select %p718, %s715, 3
        %s720 = smul.addr %s717, 4
        %s721 = sadd.s32 %s719, %s720
        %s722 = smul.addr %s721, 8
        %s723 = scalar_lea.vmem %s1, %s722
        %p724 = pneg %p104
        %p725 = pneg %p101
        %s726 = smul.u32 2, %s41
        %p727 = scmp.lt.s32.totalorder %s39, 1
        %s728 = scalar_select %p727, %s39, 1
        %p729 = scmp.lt.s32.totalorder %s726, 3
        %s730 = scalar_select %p729, %s726, 3
        %s731 = smul.addr %s728, 4
        %s732 = sadd.s32 %s730, %s731
        %s733 = smul.addr %s732, 8
        %s734 = scalar_lea.vmem %s2, %s733
        %p735 = pneg %p132
        %p736 = pneg %p129
        %s737 = smul.u32 2, %s41
        %p738 = scmp.lt.s32.totalorder %s39, 1
        %s739 = scalar_select %p738, %s39, 1
        %p740 = scmp.lt.s32.totalorder %s737, 3
        %s741 = scalar_select %p740, %s737, 3
        %s742 = smul.addr %s739, 4
        %s743 = sadd.s32 %s741, %s742
        %s744 = smul.addr %s743, 8
        %s745 = scalar_lea.vmem %s3, %s744
        %p746 = pneg %p160
        %p747 = pneg %p157
        %p748 = pneg %p181
        %p749 = pneg %p178
        %p750 = pneg %p202
        %p751 = pneg %p199
        %p752 = pneg %p223
        %p753 = pneg %p220
        %p754 = pneg %p244
        %p755 = pneg %p241
        %p756 = pneg %p265
        %p757 = pneg %p262
        %p758 = pneg %p286
        %p759 = pneg %p283
        %p760 = pneg %p307
        %p761 = pneg %p304
        %p762 = pneg %p328
        %p763 = pneg %p325
        %p764 = pneg %p349
        %p765 = pneg %p346
        %p766 = pneg %p370
        %p767 = pneg %p367
        %p768 = pneg %p391
        %p769 = pneg %p388
        %p770 = pneg %p412
        %p771 = pneg %p409
        %p772 = pneg %p433
        %p773 = pneg %p430
        %p774 = pneg %p454
        %p775 = pneg %p451
        %p776 = pneg %p475
        %p777 = pneg %p472
        %p778 = pneg %p496
        %p779 = pneg %p493
        %p780 = pneg %p524
        %p781 = pneg %p521
        %s782 = smul.u32 2, %s40
        %p783 = scmp.lt.s32.totalorder %s39, 1
        %s784 = scalar_select %p783, %s39, 1
        %p785 = scmp.lt.s32.totalorder %s782, 3
        %s786 = scalar_select %p785, %s782, 3
        %s787 = smul.addr %s784, 4
        %s788 = sadd.s32 %s786, %s787
        %s789 = smul.addr %s788, 8
        %s790 = scalar_lea.vmem %s20, %s789
        %s791 = smul.u32 2, %s40
        %p792 = scmp.lt.s32.totalorder %s39, 1
        %s793 = scalar_select %p792, %s39, 1
        %p794 = scmp.lt.s32.totalorder %s791, 3
        %s795 = scalar_select %p794, %s791, 3
        %s796 = smul.addr %s793, 4
        %s797 = sadd.s32 %s795, %s796
        %s798 = smul.addr %s797, 8
        %s799 = scalar_lea.vmem %s0, %s798
        %s800 = smul.u32 2, %s40
        %s801 = smul.u32 2, %s40
        %p802 = scmp.lt.s32.totalorder %s39, 1
        %s803 = scalar_select %p802, %s39, 1
        %p804 = scmp.lt.s32.totalorder %s801, 3
        %s805 = scalar_select %p804, %s801, 3
        %s806 = smul.addr %s803, 4
        %s807 = sadd.s32 %s805, %s806
        %s808 = smul.addr %s807, 8
        %s809 = scalar_lea.vmem %s1, %s808
        %s810 = smul.u32 2, %s40
        %s811 = smul.u32 2, %s41
        %p812 = scmp.lt.s32.totalorder %s39, 1
        %s813 = scalar_select %p812, %s39, 1
        %p814 = scmp.lt.s32.totalorder %s811, 3
        %s815 = scalar_select %p814, %s811, 3
        %s816 = smul.addr %s813, 4
        %s817 = sadd.s32 %s815, %s816
        %s818 = smul.addr %s817, 8
        %s819 = scalar_lea.vmem %s2, %s818
        %s820 = smul.u32 2, %s41
        %s821 = smul.u32 2, %s41
        %p822 = scmp.lt.s32.totalorder %s39, 1
        %s823 = scalar_select %p822, %s39, 1
        %p824 = scmp.lt.s32.totalorder %s821, 3
        %s825 = scalar_select %p824, %s821, 3
        %s826 = smul.addr %s823, 4
        %s827 = sadd.s32 %s825, %s826
        %s828 = smul.addr %s827, 8
        %s829 = scalar_lea.vmem %s3, %s828
        %s830 = smul.u32 2, %s41
        %s831 = smul.u32 2, %s40
        %p832 = scmp.lt.s32.totalorder %s39, 1
        %s833 = scalar_select %p832, %s39, 1
        %p834 = scmp.lt.s32.totalorder %s831, 3
        %s835 = scalar_select %p834, %s831, 3
        %s836 = smul.addr %s833, 4
        %s837 = sadd.s32 %s835, %s836
        %s838 = smul.addr %s837, 8
        %s839 = scalar_lea.vmem %s20, %s838
        %s840 = smul.u32 2, %s40
        %p842 = scmp.eq.s32.totalorder %s41, 0
        // Predicated region
        $region117: #{_mfuser_call.1} parent=99 // pred_check
          %p843 = pneg %p842
        $region118: #{_mfuser_call.1} parent=99 // pred_check_branch
          %845 = sbr.rel (%p843) target = $region120
        $region119: #{_mfuser_call.1} parent=99 // pred_region
          %v846 = vld [vmem:[%s799] sm:$0xff]
          %v847 = vld [vmem:[%s799 + $0x8] sm:$0xff]
          %v848 = vld [vmem:[%s809] sm:$0xff]
          %v849 = vld [vmem:[%s809 + $0x8] sm:$0xff]
          %v850 = vld [vmem:[%s4] sm:$0x1]
          %v851 = vld [vmem:[%s5] sm:$0x1]
          %852 = vadd.xlane.f32.xlu0 %v846
          %v853 = vpop.xlane.xlu0 %852
          %854 = vadd.xlane.f32.xlu0 %v847
          %v855 = vpop.xlane.xlu0 %854
          %v856 = vrcp.pop 128.0
          %v857 = vmul.f32 %v853, %v856
          %v858 = vmul.f32 %v855, %v856
          %v859 = vsub.f32 %v846, %v857
          %v860 = vsub.f32 %v847, %v858
          %v861 = vmul.f32 %v859, %v859
          %v862 = vmul.f32 %v860, %v860
          %863 = vadd.xlane.f32.xlu0 %v861
          %v864 = vpop.xlane.xlu0 %863
          %865 = vadd.xlane.f32.xlu0 %v862
          %v866 = vpop.xlane.xlu0 %865
          %v867 = vmul.f32 %v864, %v856
          %v868 = vmul.f32 %v866, %v856
          %v869 = vadd.f32 %v867, 1e-05
          %v870 = vadd.f32 %v868, 1e-05
          %v871 = vrsqrt.pop %v869
          %v872 = vrsqrt.pop %v870
          %v873 = vmul.f32 %v859, %v871
          %v874 = vmul.f32 %v860, %v872
          %v876 = vlaneseq
          %v877 = vshrl.u32 %v876, 7
          %v878 = vsub.s32 0, %v877
          %v879 = vrot.slane %v850, %v878
          %v881 = vmul.f32 %v873, %v879
          %v882 = vmul.f32 %v874, %v879
          %v884 = vlaneseq
          %v885 = vshrl.u32 %v884, 7
          %v886 = vsub.s32 0, %v885
          %v887 = vrot.slane %v851, %v886
          %v889 = vadd.f32 %v881, %v887
          %v890 = vadd.f32 %v882, %v887
          %v891 = vadd.f32 %v889, %v848
          %v892 = vadd.f32 %v890, %v849
          %893 = vst [vmem:[#allocation6] sm:$0xff] %v891
          %894 = vst [vmem:[#allocation6 + $0x8] sm:$0xff] %v892
          %v895 = vpack.c.bf16 %v892, %v891
          %v896 = vld [vmem:[#allocation9] sm:$0xf]
          %v897 = vld [vmem:[#allocation9 + $0x4] sm:$0xf]
          %v898 = vld [vmem:[#allocation9 + $0x8] sm:$0xf]
          %v899 = vld [vmem:[#allocation9 + $0xc] sm:$0xf]
          %v900 = vld [vmem:[#allocation9 + $0x10] sm:$0xf]
          %v901 = vld [vmem:[#allocation9 + $0x14] sm:$0xf]
          %v902 = vld [vmem:[#allocation9 + $0x18] sm:$0xf]
          %v903 = vld [vmem:[#allocation9 + $0x1c] sm:$0xf]
          %v904 = vld [vmem:[#allocation9 + $0x20] sm:$0xf]
          %v905 = vld [vmem:[#allocation9 + $0x24] sm:$0xf]
          %v906 = vld [vmem:[#allocation9 + $0x28] sm:$0xf]
          %v907 = vld [vmem:[#allocation9 + $0x2c] sm:$0xf]
          %v908 = vld [vmem:[#allocation9 + $0x30] sm:$0xf]
          %v909 = vld [vmem:[#allocation9 + $0x34] sm:$0xf]
          %v910 = vld [vmem:[#allocation9 + $0x38] sm:$0xf]
          %v911 = vld [vmem:[#allocation9 + $0x3c] sm:$0xf]
          %v912 = vld [vmem:[%s11] sm:$0x1]
          %v914 = vlaneseq
          %v915 = vshrl.u32 %v914, 7
          %v916 = vsub.s32 0, %v915
          %v917 = vrot.slane %v912, %v916
          %v935 = vunpack.c.l.b16 %v896
          %v936 = vunpack.c.l.b16 %v897
          %v937 = vunpack.c.l.b16 %v898
          %v938 = vunpack.c.l.b16 %v899
          %v939 = vunpack.c.l.b16 %v900
          %v940 = vunpack.c.l.b16 %v901
          %v941 = vunpack.c.l.b16 %v902
          %v942 = vunpack.c.l.b16 %v903
          %v943 = vunpack.c.l.b16 %v904
          %v944 = vunpack.c.l.b16 %v905
          %v945 = vunpack.c.l.b16 %v906
          %v946 = vunpack.c.l.b16 %v907
          %v947 = vunpack.c.l.b16 %v908
          %v948 = vunpack.c.l.b16 %v909
          %v949 = vunpack.c.l.b16 %v910
          %v950 = vunpack.c.l.b16 %v911
          %v951 = vpack.c.b16 %v936, %v935
          %v952 = vpack.c.b16 %v938, %v937
          %v953 = vpack.c.b16 %v940, %v939
          %v954 = vpack.c.b16 %v942, %v941
          %v955 = vpack.c.b16 %v944, %v943
          %v956 = vpack.c.b16 %v946, %v945
          %v957 = vpack.c.b16 %v948, %v947
          %v958 = vpack.c.b16 %v950, %v949
          %967 = vmatprep.subr.bf16.mxu0 0
          %968 = vmatpush1.bf16.msra.mxu0 %v958
          %969 = vmatprep.subr.bf16.mxu0 0
          %970 = vmatpush1.bf16.msra.mxu0 %v957
          %971 = vmatprep.subr.bf16.mxu0 0
          %972 = vmatpush1.bf16.msra.mxu0 %v956
          %973 = vmatprep.subr.bf16.mxu0 0
          %974 = vmatpush1.bf16.msra.mxu0 %v955
          %975 = vmatprep.subr.bf16.mxu0 0
          %976 = vmatpush1.bf16.msra.mxu0 %v954
          %977 = vmatprep.subr.bf16.mxu0 0
          %978 = vmatpush1.bf16.msra.mxu0 %v953
          %979 = vmatprep.subr.bf16.mxu0 0
          %980 = vmatpush1.bf16.msra.mxu0 %v952
          %981 = vmatprep.subr.bf16.mxu0 0
          %982 = vmatpush1.bf16.msra.mxu0 %v951
          %983 = vmatprep.subr.bf16.mxu0 0
          %984 = vmatpush2.bf16.msra.mxu0 0
          %985 = vmatprep.subr.bf16.mxu0 0
          %986 = vmatpush2.bf16.msra.mxu0 0
          %987 = vmatprep.subr.bf16.mxu0 0
          %988 = vmatpush2.bf16.msra.mxu0 0
          %989 = vmatprep.subr.bf16.mxu0 0
          %990 = vmatpush2.bf16.msra.mxu0 0
          %991 = vmatprep.subr.bf16.mxu0 0
          %992 = vmatpush2.bf16.msra.mxu0 0
          %993 = vmatprep.subr.bf16.mxu0 0
          %994 = vmatpush2.bf16.msra.mxu0 0
          %995 = vmatprep.subr.bf16.mxu0 0
          %996 = vmatpush2.bf16.msra.mxu0 0
          %997 = vmatprep.subr.bf16.mxu0 0
          %998 = vmatpush2.bf16.msra.mxu0 0
          %999 = vmatprep.mubr.bf16.mxu0 0
          %1000 = vmatmul.mubr.bf16.gmra.mxu0 %v895
          %v1001 = vpop.f32.mrf.mxu0
          %v1002 = vadd.f32 %v917, %v1001
          %v1003 = vpop.f32.mrf.mxu0
          %v1004 = vpop.f32.mrf.mxu0
          %v1005 = vadd.f32 %v917, %v1004
          %v1006 = vpop.f32.mrf.mxu0
          %1007 = vdwg.mxu0
          %v1008 = vpack.c.bf16 %v1005, %v1002
          %v1010 = vunpack.c.l.b16 %v1008
          %v1011 = vunpack.c.h.b16 %v1008
          %v1012 = vpack.c.b16 %v1010, %v1010
          %v1013 = vpack.c.b16 %v1011, %v1011
          %1016 = vst [vmem:[#allocation5] sm:$0xf] %v1012
          %1017 = vst [vmem:[#allocation5 + $0x4] sm:$0xf] %v1013
          %vm1018 = vcmask 7168
          %1019 = vst.msk [vmem:[#allocation2] sm:$0xff] %vm1018, -inf
          %1020 = vst.msk [vmem:[#allocation2 + $0x8] sm:$0xff] %vm1018, -inf
          %1021 = vst.msk [vmem:[#allocation3] sm:$0xff] %vm1018, 0.0
          %1022 = vst.msk [vmem:[#allocation3 + $0x8] sm:$0xff] %vm1018, 0.0
          %1023 = vst [vmem:[#allocation4] sm:$0xff] 0.0
          %1024 = vst [vmem:[#allocation4 + $0x8] sm:$0xff] 0.0
        $region120: #{_mfuser_call.1} parent=99 // pred_fallthru
          _
        %v1025 = vld [vmem:[%s819] sm:$0xff]
        %v1026 = vld [vmem:[%s819 + $0x8] sm:$0xff]
        %v1027 = vld [vmem:[%s829] sm:$0xff]
        %v1028 = vld [vmem:[%s829 + $0x8] sm:$0xff]
        %v1029 = vld [vmem:[%s4] sm:$0x1]
        %v1030 = vld [vmem:[%s5] sm:$0x1]
        %1031 = vadd.xlane.f32.xlu0 %v1025
        %v1032 = vpop.xlane.xlu0 %1031
        %1033 = vadd.xlane.f32.xlu0 %v1026
        %v1034 = vpop.xlane.xlu0 %1033
        %v1035 = vrcp.pop 128.0
        %v1036 = vmul.f32 %v1032, %v1035
        %v1037 = vmul.f32 %v1034, %v1035
        %v1038 = vsub.f32 %v1025, %v1036
        %v1039 = vsub.f32 %v1026, %v1037
        %v1040 = vmul.f32 %v1038, %v1038
        %v1041 = vmul.f32 %v1039, %v1039
        %1042 = vadd.xlane.f32.xlu0 %v1040
        %v1043 = vpop.xlane.xlu0 %1042
        %1044 = vadd.xlane.f32.xlu0 %v1041
        %v1045 = vpop.xlane.xlu0 %1044
        %v1046 = vmul.f32 %v1043, %v1035
        %v1047 = vmul.f32 %v1045, %v1035
        %v1048 = vadd.f32 %v1046, 1e-05
        %v1049 = vadd.f32 %v1047, 1e-05
        %v1050 = vrsqrt.pop %v1048
        %v1051 = vrsqrt.pop %v1049
        %v1052 = vmul.f32 %v1038, %v1050
        %v1053 = vmul.f32 %v1039, %v1051
        %v1055 = vlaneseq
        %v1056 = vshrl.u32 %v1055, 7
        %v1057 = vsub.s32 0, %v1056
        %v1058 = vrot.slane %v1029, %v1057
        %v1060 = vmul.f32 %v1052, %v1058
        %v1061 = vmul.f32 %v1053, %v1058
        %v1063 = vlaneseq
        %v1064 = vshrl.u32 %v1063, 7
        %v1065 = vsub.s32 0, %v1064
        %v1066 = vrot.slane %v1030, %v1065
        %v1068 = vadd.f32 %v1060, %v1066
        %v1069 = vadd.f32 %v1061, %v1066
        %v1070 = vadd.f32 %v1068, %v1027
        %v1071 = vadd.f32 %v1069, %v1028
        %v1072 = vpack.c.bf16 %v1071, %v1070
        %v1073 = vld [vmem:[%s12] sm:$0xff]
        %v1074 = vld [vmem:[%s12 + $0x8] sm:$0xff]
        %v1075 = vld [vmem:[%s12 + $0x10] sm:$0xff]
        %v1076 = vld [vmem:[%s12 + $0x18] sm:$0xff]
        %v1077 = vld [vmem:[%s12 + $0x20] sm:$0xff]
        %v1078 = vld [vmem:[%s12 + $0x28] sm:$0xff]
        %v1079 = vld [vmem:[%s12 + $0x30] sm:$0xff]
        %v1080 = vld [vmem:[%s12 + $0x38] sm:$0xff]
        %v1081 = vld [vmem:[%s12 + $0x40] sm:$0xff]
        %v1082 = vld [vmem:[%s12 + $0x48] sm:$0xff]
        %v1083 = vld [vmem:[%s12 + $0x50] sm:$0xff]
        %v1084 = vld [vmem:[%s12 + $0x58] sm:$0xff]
        %v1085 = vld [vmem:[%s12 + $0x60] sm:$0xff]
        %v1086 = vld [vmem:[%s12 + $0x68] sm:$0xff]
        %v1087 = vld [vmem:[%s12 + $0x70] sm:$0xff]
        %v1088 = vld [vmem:[%s12 + $0x78] sm:$0xff]
        %v1089 = vld [vmem:[%s13] sm:$0x3]
        %v1091 = vlaneseq
        %v1092 = vshrl.u32 %v1091, 7
        %v1093 = vsub.s32 0, %v1092
        %v1094 = vrot.slane %v1089, %v1093
        %v1095 = vlaneseq
        %v1096 = vshrl.u32 %v1095, 7
        %v1097 = vsub.s32 1, %v1096
        %v1098 = vrot.slane %v1089, %v1097
        %v1117 = vunpack.c.l.b16 %v1073
        %v1118 = vunpack.c.h.b16 %v1073
        %v1119 = vunpack.c.l.b16 %v1074
        %v1120 = vunpack.c.h.b16 %v1074
        %v1121 = vunpack.c.l.b16 %v1075
        %v1122 = vunpack.c.h.b16 %v1075
        %v1123 = vunpack.c.l.b16 %v1076
        %v1124 = vunpack.c.h.b16 %v1076
        %v1125 = vunpack.c.l.b16 %v1077
        %v1126 = vunpack.c.h.b16 %v1077
        %v1127 = vunpack.c.l.b16 %v1078
        %v1128 = vunpack.c.h.b16 %v1078
        %v1129 = vunpack.c.l.b16 %v1079
        %v1130 = vunpack.c.h.b16 %v1079
        %v1131 = vunpack.c.l.b16 %v1080
        %v1132 = vunpack.c.h.b16 %v1080
        %v1133 = vunpack.c.l.b16 %v1081
        %v1134 = vunpack.c.h.b16 %v1081
        %v1135 = vunpack.c.l.b16 %v1082
        %v1136 = vunpack.c.h.b16 %v1082
        %v1137 = vunpack.c.l.b16 %v1083
        %v1138 = vunpack.c.h.b16 %v1083
        %v1139 = vunpack.c.l.b16 %v1084
        %v1140 = vunpack.c.h.b16 %v1084
        %v1141 = vunpack.c.l.b16 %v1085
        %v1142 = vunpack.c.h.b16 %v1085
        %v1143 = vunpack.c.l.b16 %v1086
        %v1144 = vunpack.c.h.b16 %v1086
        %v1145 = vunpack.c.l.b16 %v1087
        %v1146 = vunpack.c.h.b16 %v1087
        %v1147 = vunpack.c.l.b16 %v1088
        %v1148 = vunpack.c.h.b16 %v1088
        %v1149 = vpack.c.b16 %v1119, %v1117
        %v1150 = vpack.c.b16 %v1120, %v1118
        %v1151 = vpack.c.b16 %v1123, %v1121
        %v1152 = vpack.c.b16 %v1124, %v1122
        %v1153 = vpack.c.b16 %v1127, %v1125
        %v1154 = vpack.c.b16 %v1128, %v1126
        %v1155 = vpack.c.b16 %v1131, %v1129
        %v1156 = vpack.c.b16 %v1132, %v1130
        %v1157 = vpack.c.b16 %v1135, %v1133
        %v1158 = vpack.c.b16 %v1136, %v1134
        %v1159 = vpack.c.b16 %v1139, %v1137
        %v1160 = vpack.c.b16 %v1140, %v1138
        %v1161 = vpack.c.b16 %v1143, %v1141
        %v1162 = vpack.c.b16 %v1144, %v1142
        %v1163 = vpack.c.b16 %v1147, %v1145
        %v1164 = vpack.c.b16 %v1148, %v1146
        %1181 = vmatprep.subr.bf16.mxu0 %v1164
        %1182 = vmatpush1.bf16.msra.mxu0 %v1163
        %1183 = vmatprep.subr.bf16.mxu0 %v1162
        %1184 = vmatpush1.bf16.msra.mxu0 %v1161
        %1185 = vmatprep.subr.bf16.mxu0 %v1160
        %1186 = vmatpush1.bf16.msra.mxu0 %v1159
        %1187 = vmatprep.subr.bf16.mxu0 %v1158
        %1188 = vmatpush1.bf16.msra.mxu0 %v1157
        %1189 = vmatprep.subr.bf16.mxu0 %v1156
        %1190 = vmatpush1.bf16.msra.mxu0 %v1155
        %1191 = vmatprep.subr.bf16.mxu0 %v1154
        %1192 = vmatpush1.bf16.msra.mxu0 %v1153
        %1193 = vmatprep.subr.bf16.mxu0 %v1152
        %1194 = vmatpush1.bf16.msra.mxu0 %v1151
        %1195 = vmatprep.subr.bf16.mxu0 %v1150
        %1196 = vmatpush1.bf16.msra.mxu0 %v1149
        %1197 = vmatprep.subr.bf16.mxu0 0
        %1198 = vmatpush2.bf16.msra.mxu0 0
        %1199 = vmatprep.subr.bf16.mxu0 0
        %1200 = vmatpush2.bf16.msra.mxu0 0
        %1201 = vmatprep.subr.bf16.mxu0 0
        %1202 = vmatpush2.bf16.msra.mxu0 0
        %1203 = vmatprep.subr.bf16.mxu0 0
        %1204 = vmatpush2.bf16.msra.mxu0 0
        %1205 = vmatprep.subr.bf16.mxu0 0
        %1206 = vmatpush2.bf16.msra.mxu0 0
        %1207 = vmatprep.subr.bf16.mxu0 0
        %1208 = vmatpush2.bf16.msra.mxu0 0
        %1209 = vmatprep.subr.bf16.mxu0 0
        %1210 = vmatpush2.bf16.msra.mxu0 0
        %1211 = vmatprep.subr.bf16.mxu0 0
        %1212 = vmatpush2.bf16.msra.mxu0 0
        %1213 = vmatprep.mubr.bf16.mxu0 0
        %1214 = vmatmul.mubr.bf16.gmra.mxu0 %v1072
        %v1215 = vpop.f32.mrf.mxu0
        %v1216 = vadd.f32 %v1094, %v1215
        %v1217 = vpop.f32.mrf.mxu0
        %v1218 = vadd.f32 %v1098, %v1217
        %v1219 = vpop.f32.mrf.mxu0
        %v1220 = vadd.f32 %v1094, %v1219
        %v1221 = vpop.f32.mrf.mxu0
        %v1222 = vadd.f32 %v1098, %v1221
        %1223 = vdwg.mxu0
        %v1224 = vpack.c.bf16 %v1220, %v1216
        %v1225 = vpack.c.bf16 %v1222, %v1218
        %v1226 = vld [vmem:[#allocation5] sm:$0xf]
        %v1227 = vld [vmem:[#allocation5 + $0x4] sm:$0xf]
        %v1230 = vunpack.c.l.b16 %v1226
        %v1231 = vunpack.c.l.b16 %v1227
        %v1232 = vpack.c.b16 %v1231, %v1230
        %1234 = vmatprep.subr.bf16.mxu0 0
        %1235 = vmatpush1.bf16.xpose.msra.mxu0 0
        %1236 = vmatprep.subr.bf16.mxu0 0
        %1237 = vmatpush1.bf16.xpose.msra.mxu0 0
        %1238 = vmatprep.subr.bf16.mxu0 0
        %1239 = vmatpush1.bf16.xpose.msra.mxu0 0
        %1240 = vmatprep.subr.bf16.mxu0 0
        %1241 = vmatpush1.bf16.xpose.msra.mxu0 0
        %1242 = vmatprep.subr.bf16.mxu0 0
        %1243 = vmatpush1.bf16.xpose.msra.mxu0 0
        %1244 = vmatprep.subr.bf16.mxu0 0
        %1245 = vmatpush1.bf16.xpose.msra.mxu0 0
        %1246 = vmatprep.subr.bf16.mxu0 0
        %1247 = vmatpush1.bf16.xpose.msra.mxu0 0
        %1248 = vmatprep.subr.bf16.mxu0 0
        %1249 = vmatpush1.bf16.xpose.msra.mxu0 %v1224
        %1250 = vmatprep.subr.bf16.mxu0 0
        %1251 = vmatpush2.bf16.xpose.msra.mxu0 0
        %1252 = vmatprep.subr.bf16.mxu0 0
        %1253 = vmatpush2.bf16.xpose.msra.mxu0 0
        %1254 = vmatprep.subr.bf16.mxu0 0
        %1255 = vmatpush2.bf16.xpose.msra.mxu0 0
        %1256 = vmatprep.subr.bf16.mxu0 0
        %1257 = vmatpush2.bf16.xpose.msra.mxu0 0
        %1258 = vmatprep.subr.bf16.mxu0 0
        %1259 = vmatpush2.bf16.xpose.msra.mxu0 0
        %1260 = vmatprep.subr.bf16.mxu0 0
        %1261 = vmatpush2.bf16.xpose.msra.mxu0 0
        %1262 = vmatprep.subr.bf16.mxu0 0
        %1263 = vmatpush2.bf16.xpose.msra.mxu0 0
        %1264 = vmatprep.subr.bf16.mxu0 0
        %1265 = vmatpush2.bf16.xpose.msra.mxu0 0
        %1266 = vmatprep.mubr.bf16.mxu0 0
        %1267 = vmatmul.mubr.bf16.gmra.mxu0 %v1232
        %v1268 = vpop.f32.mrf.mxu0
        %v1269 = vadd.f32 0.0, %v1268
        %v1270 = vpop.f32.mrf.mxu0
        %v1271 = vpop.f32.mrf.mxu0
        %v1272 = vadd.f32 0.0, %v1271
        %v1273 = vpop.f32.mrf.mxu0
        %1274 = vdwg.mxu0
        %v1275 = vld [vmem:[#allocation2] sm:$0xff]
        %v1276 = vld [vmem:[#allocation2 + $0x8] sm:$0xff]
        %vm1277 = vcmask 130048
        %v1278 = vsel %vm1277, %v1269, -inf
        %1279 = vmax.xlane.f32.xlu0 %v1278
        %v1280 = vpop.xlane.xlu0 %1279
        %v1281 = vsel %vm1277, %v1272, -inf
        %1282 = vmax.xlane.f32.xlu0 %v1281
        %v1283 = vpop.xlane.xlu0 %1282
        %v1284 = vmax.f32 %v1275, %v1280
        %v1285 = vmax.f32 %v1276, %v1283
        %v1286 = vsub.f32 %v1275, %v1284
        %v1287 = vsub.f32 %v1276, %v1285
        %v1288 = vmul.f32 %v1286, 1.442695
        %v1289 = vpow.pop %v1288
        %v1290 = vmul.f32 %v1287, 1.442695
        %v1291 = vpow.pop %v1290
        %1293 = vset.pattern.permute.xlu0 0
        %1294 = vperm.xlu0 %1293, %v1284
        %v1295 = vpop.permute.xlu0 %1294
        %1298 = vset.pattern.permute.xlu0 0
        %1299 = vperm.xlu0 %1298, %v1285
        %v1300 = vpop.permute.xlu0 %1299
        %v1302 = vsub.f32 %v1269, %v1295
        %v1303 = vsub.f32 %v1272, %v1300
        %v1304 = vmul.f32 %v1302, 1.442695
        %v1305 = vpow.pop %v1304
        %v1306 = vmul.f32 %v1303, 1.442695
        %v1307 = vpow.pop %v1306
        %v1308 = vld [vmem:[#allocation3] sm:$0xff]
        %v1309 = vld [vmem:[#allocation3 + $0x8] sm:$0xff]
        %v1310 = vmul.f32 %v1289, %v1308
        %v1311 = vmul.f32 %v1291, %v1309
        %v1312 = vsel %vm1277, %v1305, 0.0
        %1313 = vadd.xlane.f32.xlu0 %v1312
        %v1314 = vpop.xlane.xlu0 %1313
        %v1315 = vsel %vm1277, %v1307, 0.0
        %1316 = vadd.xlane.f32.xlu0 %v1315
        %v1317 = vpop.xlane.xlu0 %1316
        %v1318 = vadd.f32 %v1310, %v1314
        %v1319 = vadd.f32 %v1311, %v1317
        %vm1320 = vcmask 7168
        %1321 = vst.msk [vmem:[#allocation3] sm:$0xff] %vm1320, %v1318
        %1322 = vst.msk [vmem:[#allocation3 + $0x8] sm:$0xff] %vm1320, %v1319
        %v1323 = vld [vmem:[#allocation4] sm:$0xff]
        %v1324 = vld [vmem:[#allocation4 + $0x8] sm:$0xff]
        %1326 = vset.pattern.permute.xlu0 0
        %1327 = vperm.xlu0 %1326, %v1289
        %v1328 = vpop.permute.xlu0 %1327
        %1331 = vset.pattern.permute.xlu0 0
        %1332 = vperm.xlu0 %1331, %v1291
        %v1333 = vpop.permute.xlu0 %1332
        %v1335 = vmul.f32 %v1328, %v1323
        %v1336 = vmul.f32 %v1333, %v1324
        %v1337 = vpack.c.bf16 %v1307, %v1305
        %v1339 = vsel %vm1277, %v1337, 0
        %1341 = vmatprep.subr.bf16.mxu0 0
        %1342 = vmatpush1.bf16.msra.mxu0 0
        %1343 = vmatprep.subr.bf16.mxu0 0
        %1344 = vmatpush1.bf16.msra.mxu0 0
        %1345 = vmatprep.subr.bf16.mxu0 0
        %1346 = vmatpush1.bf16.msra.mxu0 0
        %1347 = vmatprep.subr.bf16.mxu0 0
        %1348 = vmatpush1.bf16.msra.mxu0 0
        %1349 = vmatprep.subr.bf16.mxu0 0
        %1350 = vmatpush1.bf16.msra.mxu0 0
        %1351 = vmatprep.subr.bf16.mxu0 0
        %1352 = vmatpush1.bf16.msra.mxu0 0
        %1353 = vmatprep.subr.bf16.mxu0 0
        %1354 = vmatpush1.bf16.msra.mxu0 0
        %1355 = vmatprep.subr.bf16.mxu0 0
        %1356 = vmatpush1.bf16.msra.mxu0 %v1225
        %1357 = vmatprep.subr.bf16.mxu0 0
        %1358 = vmatpush2.bf16.msra.mxu0 0
        %1359 = vmatprep.subr.bf16.mxu0 0
        %1360 = vmatpush2.bf16.msra.mxu0 0
        %1361 = vmatprep.subr.bf16.mxu0 0
        %1362 = vmatpush2.bf16.msra.mxu0 0
        %1363 = vmatprep.subr.bf16.mxu0 0
        %1364 = vmatpush2.bf16.msra.mxu0 0
        %1365 = vmatprep.subr.bf16.mxu0 0
        %1366 = vmatpush2.bf16.msra.mxu0 0
        %1367 = vmatprep.subr.bf16.mxu0 0
        %1368 = vmatpush2.bf16.msra.mxu0 0
        %1369 = vmatprep.subr.bf16.mxu0 0
        %1370 = vmatpush2.bf16.msra.mxu0 0
        %1371 = vmatprep.subr.bf16.mxu0 0
        %1372 = vmatpush2.bf16.msra.mxu0 0
        %1373 = vmatprep.mubr.bf16.mxu0 0
        %1374 = vmatmul.mubr.bf16.gmra.mxu0 %v1339
        %v1375 = vpop.f32.mrf.mxu0
        %v1376 = vadd.f32 0.0, %v1375
        %v1377 = vpop.f32.mrf.mxu0
        %v1378 = vpop.f32.mrf.mxu0
        %v1379 = vadd.f32 0.0, %v1378
        %v1380 = vpop.f32.mrf.mxu0
        %1381 = vdwg.mxu0
        %v1382 = vadd.f32 %v1335, %v1376
        %v1383 = vadd.f32 %v1336, %v1379
        %1384 = vst [vmem:[#allocation4] sm:$0xff] %v1382
        %1385 = vst [vmem:[#allocation4 + $0x8] sm:$0xff] %v1383
        %1386 = vst.msk [vmem:[#allocation2] sm:$0xff] %vm1320, %v1284
        %1387 = vst.msk [vmem:[#allocation2 + $0x8] sm:$0xff] %vm1320, %v1285
        %p1388 = scmp.eq.s32.totalorder %s41, 1
        // Predicated region
        $region121: #{_mfuser_call.1} parent=99 // pred_check
          %p1389 = pneg %p1388
        $region122: #{_mfuser_call.1} parent=99 // pred_check_branch
          %1391 = sbr.rel (%p1389) target = $region124
        $region123: #{_mfuser_call.1} parent=99 // pred_region
          %v1392 = vld [vmem:[#allocation4] sm:$0xff]
          %v1393 = vld [vmem:[#allocation4 + $0x8] sm:$0xff]
          %v1394 = vld [vmem:[#allocation3] sm:$0xff]
          %v1395 = vld [vmem:[#allocation3 + $0x8] sm:$0xff]
          %v1396 = vrcp.pop %v1394
          %v1397 = vrcp.pop %v1395
          %1399 = vset.pattern.permute.xlu0 0
          %1400 = vperm.xlu0 %1399, %v1396
          %v1401 = vpop.permute.xlu0 %1400
          %1404 = vset.pattern.permute.xlu0 0
          %1405 = vperm.xlu0 %1404, %v1397
          %v1406 = vpop.permute.xlu0 %1405
          %v1408 = vmul.f32 %v1392, %v1401
          %v1409 = vmul.f32 %v1393, %v1406
          %v1410 = vpack.c.bf16 %v1409, %v1408
          %v1411 = vld [vmem:[#allocation11] sm:$0xf]
          %v1412 = vld [vmem:[#allocation11 + $0x4] sm:$0xf]
          %v1413 = vld [vmem:[#allocation11 + $0x8] sm:$0xf]
          %v1414 = vld [vmem:[#allocation11 + $0xc] sm:$0xf]
          %v1415 = vld [vmem:[#allocation11 + $0x10] sm:$0xf]
          %v1416 = vld [vmem:[#allocation11 + $0x14] sm:$0xf]
          %v1417 = vld [vmem:[#allocation11 + $0x18] sm:$0xf]
          %v1418 = vld [vmem:[#allocation11 + $0x1c] sm:$0xf]
          %v1419 = vld [vmem:[#allocation11 + $0x20] sm:$0xf]
          %v1420 = vld [vmem:[#allocation11 + $0x24] sm:$0xf]
          %v1421 = vld [vmem:[#allocation11 + $0x28] sm:$0xf]
          %v1422 = vld [vmem:[#allocation11 + $0x2c] sm:$0xf]
          %v1423 = vld [vmem:[#allocation11 + $0x30] sm:$0xf]
          %v1424 = vld [vmem:[#allocation11 + $0x34] sm:$0xf]
          %v1425 = vld [vmem:[#allocation11 + $0x38] sm:$0xf]
          %v1426 = vld [vmem:[#allocation11 + $0x3c] sm:$0xf]
          %v1427 = vld [vmem:[%s15] sm:$0x1]
          %v1429 = vlaneseq
          %v1430 = vshrl.u32 %v1429, 7
          %v1431 = vsub.s32 0, %v1430
          %v1432 = vrot.slane %v1427, %v1431
          %v1450 = vunpack.c.l.b16 %v1411
          %v1451 = vunpack.c.l.b16 %v1412
          %v1452 = vunpack.c.l.b16 %v1413
          %v1453 = vunpack.c.l.b16 %v1414
          %v1454 = vunpack.c.l.b16 %v1415
          %v1455 = vunpack.c.l.b16 %v1416
          %v1456 = vunpack.c.l.b16 %v1417
          %v1457 = vunpack.c.l.b16 %v1418
          %v1458 = vunpack.c.l.b16 %v1419
          %v1459 = vunpack.c.l.b16 %v1420
          %v1460 = vunpack.c.l.b16 %v1421
          %v1461 = vunpack.c.l.b16 %v1422
          %v1462 = vunpack.c.l.b16 %v1423
          %v1463 = vunpack.c.l.b16 %v1424
          %v1464 = vunpack.c.l.b16 %v1425
          %v1465 = vunpack.c.l.b16 %v1426
          %v1466 = vpack.c.b16 %v1451, %v1450
          %v1467 = vpack.c.b16 %v1453, %v1452
          %v1468 = vpack.c.b16 %v1455, %v1454
          %v1469 = vpack.c.b16 %v1457, %v1456
          %v1470 = vpack.c.b16 %v1459, %v1458
          %v1471 = vpack.c.b16 %v1461, %v1460
          %v1472 = vpack.c.b16 %v1463, %v1462
          %v1473 = vpack.c.b16 %v1465, %v1464
          %1482 = vmatprep.subr.bf16.mxu0 0
          %1483 = vmatpush1.bf16.msra.mxu0 %v1473
          %1484 = vmatprep.subr.bf16.mxu0 0
          %1485 = vmatpush1.bf16.msra.mxu0 %v1472
          %1486 = vmatprep.subr.bf16.mxu0 0
          %1487 = vmatpush1.bf16.msra.mxu0 %v1471
          %1488 = vmatprep.subr.bf16.mxu0 0
          %1489 = vmatpush1.bf16.msra.mxu0 %v1470
          %1490 = vmatprep.subr.bf16.mxu0 0
          %1491 = vmatpush1.bf16.msra.mxu0 %v1469
          %1492 = vmatprep.subr.bf16.mxu0 0
          %1493 = vmatpush1.bf16.msra.mxu0 %v1468
          %1494 = vmatprep.subr.bf16.mxu0 0
          %1495 = vmatpush1.bf16.msra.mxu0 %v1467
          %1496 = vmatprep.subr.bf16.mxu0 0
          %1497 = vmatpush1.bf16.msra.mxu0 %v1466
          %1498 = vmatprep.subr.bf16.mxu0 0
          %1499 = vmatpush2.bf16.msra.mxu0 0
          %1500 = vmatprep.subr.bf16.mxu0 0
          %1501 = vmatpush2.bf16.msra.mxu0 0
          %1502 = vmatprep.subr.bf16.mxu0 0
          %1503 = vmatpush2.bf16.msra.mxu0 0
          %1504 = vmatprep.subr.bf16.mxu0 0
          %1505 = vmatpush2.bf16.msra.mxu0 0
          %1506 = vmatprep.subr.bf16.mxu0 0
          %1507 = vmatpush2.bf16.msra.mxu0 0
          %1508 = vmatprep.subr.bf16.mxu0 0
          %1509 = vmatpush2.bf16.msra.mxu0 0
          %1510 = vmatprep.subr.bf16.mxu0 0
          %1511 = vmatpush2.bf16.msra.mxu0 0
          %1512 = vmatprep.subr.bf16.mxu0 0
          %1513 = vmatpush2.bf16.msra.mxu0 0
          %1514 = vmatprep.mubr.bf16.mxu0 0
          %1515 = vmatmul.mubr.bf16.gmra.mxu0 %v1410
          %v1516 = vpop.f32.mrf.mxu0
          %v1517 = vadd.f32 %v1432, %v1516
          %v1518 = vpop.f32.mrf.mxu0
          %v1519 = vpop.f32.mrf.mxu0
          %v1520 = vadd.f32 %v1432, %v1519
          %v1521 = vpop.f32.mrf.mxu0
          %1522 = vdwg.mxu0
          %v1523 = vld [vmem:[%s799] sm:$0xff]
          %v1524 = vld [vmem:[%s799 + $0x8] sm:$0xff]
          %v1525 = vld [vmem:[#allocation6] sm:$0xff]
          %v1526 = vld [vmem:[#allocation6 + $0x8] sm:$0xff]
          %v1527 = vadd.f32 %v1523, %v1525
          %v1528 = vadd.f32 %v1524, %v1526
          %v1529 = vadd.f32 %v1527, %v1517
          %v1530 = vadd.f32 %v1528, %v1520
          %v1531 = vld [vmem:[%s6] sm:$0x1]
          %v1532 = vld [vmem:[#allocation7] sm:$0x1]
          %1533 = vadd.xlane.f32.xlu0 %v1529
          %v1534 = vpop.xlane.xlu0 %1533
          %1535 = vadd.xlane.f32.xlu0 %v1530
          %v1536 = vpop.xlane.xlu0 %1535
          %v1537 = vmul.f32 %v1534, %v1035
          %v1538 = vmul.f32 %v1536, %v1035
          %v1539 = vsub.f32 %v1529, %v1537
          %v1540 = vsub.f32 %v1530, %v1538
          %v1541 = vmul.f32 %v1539, %v1539
          %v1542 = vmul.f32 %v1540, %v1540
          %1543 = vadd.xlane.f32.xlu0 %v1541
          %v1544 = vpop.xlane.xlu0 %1543
          %1545 = vadd.xlane.f32.xlu0 %v1542
          %v1546 = vpop.xlane.xlu0 %1545
          %v1547 = vmul.f32 %v1544, %v1035
          %v1548 = vmul.f32 %v1546, %v1035
          %v1549 = vadd.f32 %v1547, 1e-05
          %v1550 = vadd.f32 %v1548, 1e-05
          %v1551 = vrsqrt.pop %v1549
          %v1552 = vrsqrt.pop %v1550
          %v1553 = vmul.f32 %v1539, %v1551
          %v1554 = vmul.f32 %v1540, %v1552
          %v1556 = vlaneseq
          %v1557 = vshrl.u32 %v1556, 7
          %v1558 = vsub.s32 0, %v1557
          %v1559 = vrot.slane %v1531, %v1558
          %v1561 = vmul.f32 %v1553, %v1559
          %v1562 = vmul.f32 %v1554, %v1559
          %v1564 = vlaneseq
          %v1565 = vshrl.u32 %v1564, 7
          %v1566 = vsub.s32 0, %v1565
          %v1567 = vrot.slane %v1532, %v1566
          %v1569 = vadd.f32 %v1561, %v1567
          %v1570 = vadd.f32 %v1562, %v1567
          %v1571 = vpack.c.bf16 %v1570, %v1569
          %v1572 = vld [vmem:[%s16] sm:$0xff]
          %v1573 = vld [vmem:[%s16 + $0x8] sm:$0xff]
          %v1574 = vld [vmem:[%s16 + $0x10] sm:$0xff]
          %v1575 = vld [vmem:[%s16 + $0x18] sm:$0xff]
          %v1576 = vld [vmem:[%s16 + $0x20] sm:$0xff]
          %v1577 = vld [vmem:[%s16 + $0x28] sm:$0xff]
          %v1578 = vld [vmem:[%s16 + $0x30] sm:$0xff]
          %v1579 = vld [vmem:[%s16 + $0x38] sm:$0xff]
          %v1580 = vld [vmem:[%s16 + $0x40] sm:$0xff]
          %v1581 = vld [vmem:[%s16 + $0x48] sm:$0xff]
          %v1582 = vld [vmem:[%s16 + $0x50] sm:$0xff]
          %v1583 = vld [vmem:[%s16 + $0x58] sm:$0xff]
          %v1584 = vld [vmem:[%s16 + $0x60] sm:$0xff]
          %v1585 = vld [vmem:[%s16 + $0x68] sm:$0xff]
          %v1586 = vld [vmem:[%s16 + $0x70] sm:$0xff]
          %v1587 = vld [vmem:[%s16 + $0x78] sm:$0xff]
          %v1588 = vld [vmem:[%s17] sm:$0x3]
          %v1590 = vlaneseq
          %v1591 = vshrl.u32 %v1590, 7
          %v1592 = vsub.s32 0, %v1591
          %v1593 = vrot.slane %v1588, %v1592
          %v1594 = vlaneseq
          %v1595 = vshrl.u32 %v1594, 7
          %v1596 = vsub.s32 1, %v1595
          %v1597 = vrot.slane %v1588, %v1596
          %v1616 = vunpack.c.l.b16 %v1572
          %v1617 = vunpack.c.h.b16 %v1572
          %v1618 = vunpack.c.l.b16 %v1573
          %v1619 = vunpack.c.h.b16 %v1573
          %v1620 = vunpack.c.l.b16 %v1574
          %v1621 = vunpack.c.h.b16 %v1574
          %v1622 = vunpack.c.l.b16 %v1575
          %v1623 = vunpack.c.h.b16 %v1575
          %v1624 = vunpack.c.l.b16 %v1576
          %v1625 = vunpack.c.h.b16 %v1576
          %v1626 = vunpack.c.l.b16 %v1577
          %v1627 = vunpack.c.h.b16 %v1577
          %v1628 = vunpack.c.l.b16 %v1578
          %v1629 = vunpack.c.h.b16 %v1578
          %v1630 = vunpack.c.l.b16 %v1579
          %v1631 = vunpack.c.h.b16 %v1579
          %v1632 = vunpack.c.l.b16 %v1580
          %v1633 = vunpack.c.h.b16 %v1580
          %v1634 = vunpack.c.l.b16 %v1581
          %v1635 = vunpack.c.h.b16 %v1581
          %v1636 = vunpack.c.l.b16 %v1582
          %v1637 = vunpack.c.h.b16 %v1582
          %v1638 = vunpack.c.l.b16 %v1583
          %v1639 = vunpack.c.h.b16 %v1583
          %v1640 = vunpack.c.l.b16 %v1584
          %v1641 = vunpack.c.h.b16 %v1584
          %v1642 = vunpack.c.l.b16 %v1585
          %v1643 = vunpack.c.h.b16 %v1585
          %v1644 = vunpack.c.l.b16 %v1586
          %v1645 = vunpack.c.h.b16 %v1586
          %v1646 = vunpack.c.l.b16 %v1587
          %v1647 = vunpack.c.h.b16 %v1587
          %v1648 = vpack.c.b16 %v1618, %v1616
          %v1649 = vpack.c.b16 %v1619, %v1617
          %v1650 = vpack.c.b16 %v1622, %v1620
          %v1651 = vpack.c.b16 %v1623, %v1621
          %v1652 = vpack.c.b16 %v1626, %v1624
          %v1653 = vpack.c.b16 %v1627, %v1625
          %v1654 = vpack.c.b16 %v1630, %v1628
          %v1655 = vpack.c.b16 %v1631, %v1629
          %v1656 = vpack.c.b16 %v1634, %v1632
          %v1657 = vpack.c.b16 %v1635, %v1633
          %v1658 = vpack.c.b16 %v1638, %v1636
          %v1659 = vpack.c.b16 %v1639, %v1637
          %v1660 = vpack.c.b16 %v1642, %v1640
          %v1661 = vpack.c.b16 %v1643, %v1641
          %v1662 = vpack.c.b16 %v1646, %v1644
          %v1663 = vpack.c.b16 %v1647, %v1645
          %1680 = vmatprep.subr.bf16.mxu0 %v1663
          %1681 = vmatpush1.bf16.msra.mxu0 %v1662
          %1682 = vmatprep.subr.bf16.mxu0 %v1661
          %1683 = vmatpush1.bf16.msra.mxu0 %v1660
          %1684 = vmatprep.subr.bf16.mxu0 %v1659
          %1685 = vmatpush1.bf16.msra.mxu0 %v1658
          %1686 = vmatprep.subr.bf16.mxu0 %v1657
          %1687 = vmatpush1.bf16.msra.mxu0 %v1656
          %1688 = vmatprep.subr.bf16.mxu0 %v1655
          %1689 = vmatpush1.bf16.msra.mxu0 %v1654
          %1690 = vmatprep.subr.bf16.mxu0 %v1653
          %1691 = vmatpush1.bf16.msra.mxu0 %v1652
          %1692 = vmatprep.subr.bf16.mxu0 %v1651
          %1693 = vmatpush1.bf16.msra.mxu0 %v1650
          %1694 = vmatprep.subr.bf16.mxu0 %v1649
          %1695 = vmatpush1.bf16.msra.mxu0 %v1648
          %1696 = vmatprep.subr.bf16.mxu0 0
          %1697 = vmatpush2.bf16.msra.mxu0 0
          %1698 = vmatprep.subr.bf16.mxu0 0
          %1699 = vmatpush2.bf16.msra.mxu0 0
          %1700 = vmatprep.subr.bf16.mxu0 0
          %1701 = vmatpush2.bf16.msra.mxu0 0
          %1702 = vmatprep.subr.bf16.mxu0 0
          %1703 = vmatpush2.bf16.msra.mxu0 0
          %1704 = vmatprep.subr.bf16.mxu0 0
          %1705 = vmatpush2.bf16.msra.mxu0 0
          %1706 = vmatprep.subr.bf16.mxu0 0
          %1707 = vmatpush2.bf16.msra.mxu0 0
          %1708 = vmatprep.subr.bf16.mxu0 0
          %1709 = vmatpush2.bf16.msra.mxu0 0
          %1710 = vmatprep.subr.bf16.mxu0 0
          %1711 = vmatpush2.bf16.msra.mxu0 0
          %1712 = vmatprep.mubr.bf16.mxu0 0
          %1713 = vmatmul.mubr.bf16.gmra.mxu0 %v1571
          %v1714 = vpop.f32.mrf.mxu0
          %v1715 = vadd.f32 %v1593, %v1714
          %v1716 = vpop.f32.mrf.mxu0
          %v1717 = vadd.f32 %v1597, %v1716
          %v1718 = vpop.f32.mrf.mxu0
          %v1719 = vadd.f32 %v1593, %v1718
          %v1720 = vpop.f32.mrf.mxu0
          %v1721 = vadd.f32 %v1597, %v1720
          %1722 = vdwg.mxu0
          %v1723 = vmax.f32 %v1715, 0.0
          %v1724 = vmax.f32 %v1717, 0.0
          %v1725 = vmax.f32 %v1719, 0.0
          %v1726 = vmax.f32 %v1721, 0.0
          %v1727 = vpack.c.bf16 %v1725, %v1723
          %v1728 = vpack.c.bf16 %v1726, %v1724
          %v1729 = vld [vmem:[#allocation12] sm:$0xf]
          %v1730 = vld [vmem:[#allocation12 + $0x4] sm:$0xf]
          %v1731 = vld [vmem:[#allocation12 + $0x8] sm:$0xf]
          %v1732 = vld [vmem:[#allocation12 + $0xc] sm:$0xf]
          %v1733 = vld [vmem:[#allocation12 + $0x10] sm:$0xf]
          %v1734 = vld [vmem:[#allocation12 + $0x14] sm:$0xf]
          %v1735 = vld [vmem:[#allocation12 + $0x18] sm:$0xf]
          %v1736 = vld [vmem:[#allocation12 + $0x1c] sm:$0xf]
          %v1737 = vld [vmem:[#allocation12 + $0x20] sm:$0xf]
          %v1738 = vld [vmem:[#allocation12 + $0x24] sm:$0xf]
          %v1739 = vld [vmem:[#allocation12 + $0x28] sm:$0xf]
          %v1740 = vld [vmem:[#allocation12 + $0x2c] sm:$0xf]
          %v1741 = vld [vmem:[#allocation12 + $0x30] sm:$0xf]
          %v1742 = vld [vmem:[#allocation12 + $0x34] sm:$0xf]
          %v1743 = vld [vmem:[#allocation12 + $0x38] sm:$0xf]
          %v1744 = vld [vmem:[#allocation12 + $0x3c] sm:$0xf]
          %v1745 = vld [vmem:[#allocation12 + $0x40] sm:$0xf]
          %v1746 = vld [vmem:[#allocation12 + $0x44] sm:$0xf]
          %v1747 = vld [vmem:[#allocation12 + $0x48] sm:$0xf]
          %v1748 = vld [vmem:[#allocation12 + $0x4c] sm:$0xf]
          %v1749 = vld [vmem:[#allocation12 + $0x50] sm:$0xf]
          %v1750 = vld [vmem:[#allocation12 + $0x54] sm:$0xf]
          %v1751 = vld [vmem:[#allocation12 + $0x58] sm:$0xf]
          %v1752 = vld [vmem:[#allocation12 + $0x5c] sm:$0xf]
          %v1753 = vld [vmem:[#allocation12 + $0x60] sm:$0xf]
          %v1754 = vld [vmem:[#allocation12 + $0x64] sm:$0xf]
          %v1755 = vld [vmem:[#allocation12 + $0x68] sm:$0xf]
          %v1756 = vld [vmem:[#allocation12 + $0x6c] sm:$0xf]
          %v1757 = vld [vmem:[#allocation12 + $0x70] sm:$0xf]
          %v1758 = vld [vmem:[#allocation12 + $0x74] sm:$0xf]
          %v1759 = vld [vmem:[#allocation12 + $0x78] sm:$0xf]
          %v1760 = vld [vmem:[#allocation12 + $0x7c] sm:$0xf]
          %v1761 = vld [vmem:[%s19] sm:$0x1]
          %v1763 = vlaneseq
          %v1764 = vshrl.u32 %v1763, 7
          %v1765 = vsub.s32 0, %v1764
          %v1766 = vrot.slane %v1761, %v1765
          %v1800 = vunpack.c.l.b16 %v1729
          %v1801 = vunpack.c.l.b16 %v1730
          %v1802 = vunpack.c.l.b16 %v1731
          %v1803 = vunpack.c.l.b16 %v1732
          %v1804 = vunpack.c.l.b16 %v1733
          %v1805 = vunpack.c.l.b16 %v1734
          %v1806 = vunpack.c.l.b16 %v1735
          %v1807 = vunpack.c.l.b16 %v1736
          %v1808 = vunpack.c.l.b16 %v1737
          %v1809 = vunpack.c.l.b16 %v1738
          %v1810 = vunpack.c.l.b16 %v1739
          %v1811 = vunpack.c.l.b16 %v1740
          %v1812 = vunpack.c.l.b16 %v1741
          %v1813 = vunpack.c.l.b16 %v1742
          %v1814 = vunpack.c.l.b16 %v1743
          %v1815 = vunpack.c.l.b16 %v1744
          %v1816 = vunpack.c.l.b16 %v1745
          %v1817 = vunpack.c.l.b16 %v1746
          %v1818 = vunpack.c.l.b16 %v1747
          %v1819 = vunpack.c.l.b16 %v1748
          %v1820 = vunpack.c.l.b16 %v1749
          %v1821 = vunpack.c.l.b16 %v1750
          %v1822 = vunpack.c.l.b16 %v1751
          %v1823 = vunpack.c.l.b16 %v1752
          %v1824 = vunpack.c.l.b16 %v1753
          %v1825 = vunpack.c.l.b16 %v1754
          %v1826 = vunpack.c.l.b16 %v1755
          %v1827 = vunpack.c.l.b16 %v1756
          %v1828 = vunpack.c.l.b16 %v1757
          %v1829 = vunpack.c.l.b16 %v1758
          %v1830 = vunpack.c.l.b16 %v1759
          %v1831 = vunpack.c.l.b16 %v1760
          %v1832 = vpack.c.b16 %v1801, %v1800
          %v1833 = vpack.c.b16 %v1803, %v1802
          %v1834 = vpack.c.b16 %v1805, %v1804
          %v1835 = vpack.c.b16 %v1807, %v1806
          %v1836 = vpack.c.b16 %v1809, %v1808
          %v1837 = vpack.c.b16 %v1811, %v1810
          %v1838 = vpack.c.b16 %v1813, %v1812
          %v1839 = vpack.c.b16 %v1815, %v1814
          %v1840 = vpack.c.b16 %v1817, %v1816
          %v1841 = vpack.c.b16 %v1819, %v1818
          %v1842 = vpack.c.b16 %v1821, %v1820
          %v1843 = vpack.c.b16 %v1823, %v1822
          %v1844 = vpack.c.b16 %v1825, %v1824
          %v1845 = vpack.c.b16 %v1827, %v1826
          %v1846 = vpack.c.b16 %v1829, %v1828
          %v1847 = vpack.c.b16 %v1831, %v1830
          %1864 = vmatprep.subr.bf16.mxu0 0
          %1865 = vmatpush1.bf16.msra.mxu0 %v1839
          %1866 = vmatprep.subr.bf16.mxu0 0
          %1867 = vmatpush1.bf16.msra.mxu0 %v1838
          %1868 = vmatprep.subr.bf16.mxu0 0
          %1869 = vmatpush1.bf16.msra.mxu0 %v1837
          %1870 = vmatprep.subr.bf16.mxu0 0
          %1871 = vmatpush1.bf16.msra.mxu0 %v1836
          %1872 = vmatprep.subr.bf16.mxu0 0
          %1873 = vmatpush1.bf16.msra.mxu0 %v1835
          %1874 = vmatprep.subr.bf16.mxu0 0
          %1875 = vmatpush1.bf16.msra.mxu0 %v1834
          %1876 = vmatprep.subr.bf16.mxu0 0
          %1877 = vmatpush1.bf16.msra.mxu0 %v1833
          %1878 = vmatprep.subr.bf16.mxu0 0
          %1879 = vmatpush1.bf16.msra.mxu0 %v1832
          %1880 = vmatprep.subr.bf16.mxu0 0
          %1881 = vmatpush2.bf16.msra.mxu0 %v1847
          %1882 = vmatprep.subr.bf16.mxu0 0
          %1883 = vmatpush2.bf16.msra.mxu0 %v1846
          %1884 = vmatprep.subr.bf16.mxu0 0
          %1885 = vmatpush2.bf16.msra.mxu0 %v1845
          %1886 = vmatprep.subr.bf16.mxu0 0
          %1887 = vmatpush2.bf16.msra.mxu0 %v1844
          %1888 = vmatprep.subr.bf16.mxu0 0
          %1889 = vmatpush2.bf16.msra.mxu0 %v1843
          %1890 = vmatprep.subr.bf16.mxu0 0
          %1891 = vmatpush2.bf16.msra.mxu0 %v1842
          %1892 = vmatprep.subr.bf16.mxu0 0
          %1893 = vmatpush2.bf16.msra.mxu0 %v1841
          %1894 = vmatprep.subr.bf16.mxu0 0
          %1895 = vmatpush2.bf16.msra.mxu0 %v1840
          %1896 = vmatprep.mubr.bf16.mxu0 %v1728
          %1897 = vmatmul.mubr.bf16.gmra.mxu0 %v1727
          %v1898 = vpop.f32.mrf.mxu0
          %v1899 = vadd.f32 %v1766, %v1898
          %v1900 = vpop.f32.mrf.mxu0
          %v1901 = vpop.f32.mrf.mxu0
          %v1902 = vadd.f32 %v1766, %v1901
          %v1903 = vpop.f32.mrf.mxu0
          %1904 = vdwg.mxu0
          %v1905 = vadd.f32 %v1529, %v1899
          %v1906 = vadd.f32 %v1530, %v1902
          %v1907 = vld [vmem:[%s8] sm:$0x1]
          %v1908 = vld [vmem:[%s9] sm:$0x1]
          %1909 = vadd.xlane.f32.xlu0 %v1905
          %v1910 = vpop.xlane.xlu0 %1909
          %1911 = vadd.xlane.f32.xlu0 %v1906
          %v1912 = vpop.xlane.xlu0 %1911
          %v1913 = vmul.f32 %v1910, %v1035
          %v1914 = vmul.f32 %v1912, %v1035
          %v1915 = vsub.f32 %v1905, %v1913
          %v1916 = vsub.f32 %v1906, %v1914
          %v1917 = vmul.f32 %v1915, %v1915
          %v1918 = vmul.f32 %v1916, %v1916
          %1919 = vadd.xlane.f32.xlu0 %v1917
          %v1920 = vpop.xlane.xlu0 %1919
          %1921 = vadd.xlane.f32.xlu0 %v1918
          %v1922 = vpop.xlane.xlu0 %1921
          %v1923 = vmul.f32 %v1920, %v1035
          %v1924 = vmul.f32 %v1922, %v1035
          %v1925 = vadd.f32 %v1923, 1e-05
          %v1926 = vadd.f32 %v1924, 1e-05
          %v1927 = vrsqrt.pop %v1925
          %v1928 = vrsqrt.pop %v1926
          %v1929 = vmul.f32 %v1915, %v1927
          %v1930 = vmul.f32 %v1916, %v1928
          %v1932 = vlaneseq
          %v1933 = vshrl.u32 %v1932, 7
          %v1934 = vsub.s32 0, %v1933
          %v1935 = vrot.slane %v1907, %v1934
          %v1937 = vmul.f32 %v1929, %v1935
          %v1938 = vmul.f32 %v1930, %v1935
          %v1940 = vlaneseq
          %v1941 = vshrl.u32 %v1940, 7
          %v1942 = vsub.s32 0, %v1941
          %v1943 = vrot.slane %v1908, %v1942
          %v1945 = vadd.f32 %v1937, %v1943
          %v1946 = vadd.f32 %v1938, %v1943
          %1947 = vst [vmem:[%s839] sm:$0xff] %v1945
          %1948 = vst [vmem:[%s839 + $0x8] sm:$0xff] %v1946
        $region124: #{_mfuser_call.1} parent=99 // pred_fallthru
          _
        %s1949 = smul.u32 2, %s40
        %p1950 = scmp.lt.s32.totalorder %s39, 1
        %s1951 = scalar_select %p1950, %s39, 1
        %p1952 = scmp.lt.s32.totalorder %s1949, 3
        %s1953 = scalar_select %p1952, %s1949, 3
        %s1954 = smul.addr %s1951, 4
        %s1955 = sadd.s32 %s1953, %s1954
        %s1956 = smul.addr %s1955, 8
        %s1957 = scalar_lea.vmem %s20, %s1956
        // Predicated region
        $region125: #{_mfuser_call.1} parent=99 // pred_check
          %p1958 = pneg %p521
        $region126: #{_mfuser_call.1} parent=99 // pred_check_branch
          %1960 = sbr.rel (%p1958) target = $region128
        $region127: #{_mfuser_call.1} parent=99 // pred_region
          %s1961 = smul.u32 2, %s40
        $region128: #{_mfuser_call.1} parent=99 // pred_fallthru
          _
      $region100: #{_mfuser_call.1} parent=5 // pred_fallthru
        _
      %p1962 = scmp.le.s32.totalorder 2, %s29
      // Predicated region
      $region129: #{_mfuser_call.1} parent=5 // pred_check
        %p1963 = pneg %p1962
      $region130: #{_mfuser_call.1} parent=5 // pred_check_branch
        %1965 = sbr.rel (%p1963) target = $region132
      $region131: #{_mfuser_call.1} parent=5 // pred_region
        %s1966 = ssub.s32 %s29, 2
        // Predicated region
        $region133: #{_mfuser_call.1} parent=131 // pred_check
          %p1967 = pneg %p527
        $region134: #{_mfuser_call.1} parent=131 // pred_check_branch
          %1969 = sbr.rel (%p1967) target = $region136
        $region135: #{_mfuser_call.1} parent=131 // pred_region
          %s1970 = smul.u32 2, %s43
          %p1971 = scmp.lt.s32.totalorder %s42, 1
          %s1972 = scalar_select %p1971, %s42, 1
          %p1973 = scmp.lt.s32.totalorder %s1970, 3
          %s1974 = scalar_select %p1973, %s1970, 3
          %s1975 = smul.addr %s1972, 4
          %s1976 = sadd.s32 %s1974, %s1975
          %s1977 = smul.addr %s1976, 8
          %s1978 = scalar_lea.vmem %s20, %s1977
        $region136: #{_mfuser_call.1} parent=131 // pred_fallthru
          _
      $region132: #{_mfuser_call.1} parent=5 // pred_fallthru
        _
    $region6: #{_mfuser_call.1} parent=1 // loop_footer
      %s33 = sadd.s32 1, %s29
    $region7: #{_mfuser_call.1} parent=1 // loop_footer_branch
      %28 = sbr.rel target = $region3
    $region8: #{_mfuser_call.1} parent=1 // loop_exit
      _
    %1979 = vsyncpa [#allocation8], 1
    %s1980 = scalar_lea.sflag [#allocation8], 1
    %1981 = vsyncpa %s1980, 1
    %1982 = vsyncpa [#allocation10], 1
    %1983 = vsyncpa [#allocation13], 1

</llo_original>
